<compile_context>
chip_gen: v5e
topology: v5e:2x2
jax: 0.10.0
libtpu: 0.0.40
codegen_flags: <defaults>
</compile_context>

<pallas_src>
import functools
import itertools

import numpy as np
import jax
import jax.numpy as jnp
from jax.experimental import pallas as pl
from jax.experimental.pallas import tpu as pltpu

PRIMITIVES = [
    "none", "max_pool_3x3", "avg_pool_3x3", "skip_connect",
    "sep_conv_3x3", "sep_conv_5x5", "dil_conv_3x3", "dil_conv_5x5",
]

_VMEM_LIMIT = 32 * 1024 * 1024      # scoped VMEM limit, safe on v5e/v6e/v7x
_BLOCK_BYTES = 2 * 1024 * 1024      # target bytes of tiled operands per step
_EPS = 1e-5


def _row_tile(m, bytes_per_row):
    """Row tile from a VMEM byte budget: multiple of 8, or the full extent."""
    tm = max(8, min(8192, _BLOCK_BYTES // max(1, bytes_per_row)))
    tm = (tm // 8) * 8
    return m if tm >= m else tm


# ----------------------------------------------------------------------------
# Pallas kernels
# ----------------------------------------------------------------------------

def _mm_bn_kernel(a_ref, w_ref, o_ref, sum_ref, ssq_ref, *, m_total, tm,
                  apply_relu):
    """(optional ReLU) -> matmul (bf16 MXU, f32 acc) -> training-mode BN.

    Two-phase grid (2, nt): phase 0 accumulates masked per-channel sum/sumsq
    into VMEM scratch; phase 1 recomputes the (cheap, K~N) matmul and writes
    the normalized bf16 output.  Output index_map pins phase 0 to block 0 so
    no intermediate writebacks happen."""
    ph = pl.program_id(0)
    i = pl.program_id(1)

    @pl.when(jnp.logical_and(ph == 0, i == 0))
    def _():
        sum_ref[...] = jnp.zeros_like(sum_ref)
        ssq_ref[...] = jnp.zeros_like(ssq_ref)

    a = a_ref[...]
    if apply_relu:
        a = jnp.maximum(a, 0)             # exact in bf16
    y = jnp.dot(a, w_ref[...], preferred_element_type=jnp.float32)

    @pl.when(ph == 0)
    def _():
        if m_total % tm:                  # ragged last block: mask the stats
            rows = jax.lax.broadcasted_iota(jnp.int32, y.shape, 0) + i * tm
            ym = jnp.where(rows < m_total, y, 0.0)
        else:
            ym = y
        sum_ref[...] += jnp.sum(ym, axis=0, keepdims=True)
        ssq_ref[...] += jnp.sum(ym * ym, axis=0, keepdims=True)

    @pl.when(ph == 1)
    def _():
        inv_m = 1.0 / m_total
        mean = sum_ref[...] * inv_m
        var = jnp.maximum(ssq_ref[...] * inv_m - mean * mean, 0.0)
        o_ref[...] = ((y - mean) * jax.lax.rsqrt(var + _EPS)).astype(o_ref.dtype)


@functools.partial(jax.jit, static_argnames=("apply_relu",))
def mm_bn_p(a, w, *, apply_relu):
    """a: [M,K], w: [K,N] -> BN(matmul(relu?(a), w)) : [M,N] bf16.  K ~ N path."""
    M, K = a.shape
    N = w.shape[1]
    tm = _row_tile(M, 2 * (K + N))
    nt = pl.cdiv(M, tm)
    kern = functools.partial(_mm_bn_kernel, m_total=M, tm=tm,
                             apply_relu=apply_relu)
    return pl.pallas_call(
        kern,
        out_shape=jax.ShapeDtypeStruct((M, N), jnp.bfloat16),
        grid=(2, nt),
        in_specs=[
            pl.BlockSpec((tm, K), lambda ph, i: (i, 0)),
            pl.BlockSpec((K, N), lambda ph, i: (0, 0)),
        ],
        out_specs=pl.BlockSpec((tm, N), lambda ph, i: (i * ph, 0)),
        scratch_shapes=[pltpu.VMEM((1, N), jnp.float32),
                        pltpu.VMEM((1, N), jnp.float32)],
        compiler_params=pltpu.CompilerParams(
            dimension_semantics=("arbitrary", "arbitrary"),
            vmem_limit_bytes=_VMEM_LIMIT),
    )(a.astype(jnp.bfloat16), w.astype(jnp.bfloat16))


def _mm_stats_kernel(a_ref, w_ref, y_ref, st_ref, sum_ref, ssq_ref, *,
                     m_total, tm, apply_relu):
    """Single-pass wide-K matmul: writes unnormalized bf16 y + BN sum/sumsq."""
    i = pl.program_id(0)

    @pl.when(i == 0)
    def _():
        sum_ref[...] = jnp.zeros_like(sum_ref)
        ssq_ref[...] = jnp.zeros_like(ssq_ref)

    a = a_ref[...]
    if apply_relu:
        a = jnp.maximum(a, 0)
    y = jnp.dot(a, w_ref[...], preferred_element_type=jnp.float32)
    if m_total % tm:
        rows = jax.lax.broadcasted_iota(jnp.int32, y.shape, 0) + i * tm
        ym = jnp.where(rows < m_total, y, 0.0)
    else:
        ym = y
    sum_ref[...] += jnp.sum(ym, axis=0, keepdims=True)
    ssq_ref[...] += jnp.sum(ym * ym, axis=0, keepdims=True)
    y_ref[...] = y.astype(y_ref.dtype)

    @pl.when(i == pl.num_programs(0) - 1)
    def _():
        st_ref[0:1, :] = sum_ref[...]
        st_ref[1:2, :] = ssq_ref[...]


@functools.partial(jax.jit, static_argnames=("apply_relu",))
def mm_stats_p(a, w, *, apply_relu=True):
    """a: [M,K] bf16, w: [K,N] bf16 -> (y [M,N] bf16, stats [2,N] f32)."""
    M, K = a.shape
    N = w.shape[1]
    tm = _row_tile(M, 2 * (K + N))
    nt = pl.cdiv(M, tm)
    kern = functools.partial(_mm_stats_kernel, m_total=M, tm=tm,
                             apply_relu=apply_relu)
    return pl.pallas_call(
        kern,
        out_shape=(jax.ShapeDtypeStruct((M, N), jnp.bfloat16),
                   jax.ShapeDtypeStruct((2, N), jnp.float32)),
        grid=(nt,),
        in_specs=[
            pl.BlockSpec((tm, K), lambda i: (i, 0)),
            pl.BlockSpec((K, N), lambda i: (0, 0)),
        ],
        out_specs=(pl.BlockSpec((tm, N), lambda i: (i, 0)),
                   pl.BlockSpec((2, N), lambda i: (0, 0))),
        scratch_shapes=[pltpu.VMEM((1, N), jnp.float32),
                        pltpu.VMEM((1, N), jnp.float32)],
        compiler_params=pltpu.CompilerParams(
            dimension_semantics=("arbitrary",),
            vmem_limit_bytes=_VMEM_LIMIT),
    )(a.astype(jnp.bfloat16), w.astype(jnp.bfloat16))


def _bn_apply_kernel(y_ref, st_ref, o_ref, *, m_total):
    y = y_ref[...].astype(jnp.float32)
    inv_m = 1.0 / m_total
    mean = st_ref[0:1, :] * inv_m
    var = jnp.maximum(st_ref[1:2, :] * inv_m - mean * mean, 0.0)
    o_ref[...] = ((y - mean) * jax.lax.rsqrt(var + _EPS)).astype(o_ref.dtype)


@jax.jit
def bn_apply_p(y, st):
    """Row-parallel normalize using precomputed per-channel sum/sumsq."""
    M, N = y.shape
    tm = _row_tile(M, 2 * 2 * N)
    nt = pl.cdiv(M, tm)
    kern = functools.partial(_bn_apply_kernel, m_total=M)
    return pl.pallas_call(
        kern,
        out_shape=jax.ShapeDtypeStruct((M, N), jnp.bfloat16),
        grid=(nt,),
        in_specs=[
            pl.BlockSpec((tm, N), lambda i: (i, 0)),
            pl.BlockSpec((2, N), lambda i: (0, 0)),
        ],
        out_specs=pl.BlockSpec((tm, N), lambda i: (i, 0)),
        compiler_params=pltpu.CompilerParams(
            dimension_semantics=("parallel",),
            vmem_limit_bytes=_VMEM_LIMIT),
    )(y, st)


def _maxpool_stats_kernel(p_ref, o_ref, st_ref, sum_ref, ssq_ref, *,
                          m_total, tm):
    i = pl.program_id(0)

    @pl.when(i == 0)
    def _():
        sum_ref[...] = jnp.zeros_like(sum_ref)
        ssq_ref[...] = jnp.zeros_like(ssq_ref)

    y = jnp.max(p_ref[...].astype(jnp.float32), axis=0)
    if m_total % tm:
        rows = jax.lax.broadcasted_iota(jnp.int32, y.shape, 0) + i * tm
        ym = jnp.where(rows < m_total, y, 0.0)
    else:
        ym = y
    sum_ref[...] += jnp.sum(ym, axis=0, keepdims=True)
    ssq_ref[...] += jnp.sum(ym * ym, axis=0, keepdims=True)
    o_ref[...] = y.astype(o_ref.dtype)

    @pl.when(i == pl.num_programs(0) - 1)
    def _():
        st_ref[0:1, :] = sum_ref[...]
        st_ref[1:2, :] = ssq_ref[...]


@jax.jit
def maxpool_stats_p(patches):
    KK, M, C = patches.shape
    tm = _row_tile(M, 2 * C * (KK + 1))
    nt = pl.cdiv(M, tm)
    kern = functools.partial(_maxpool_stats_kernel, m_total=M, tm=tm)
    return pl.pallas_call(
        kern,
        out_shape=(jax.ShapeDtypeStruct((M, C), jnp.bfloat16),
                   jax.ShapeDtypeStruct((2, C), jnp.float32)),
        grid=(nt,),
        in_specs=[pl.BlockSpec((KK, tm, C), lambda i: (0, i, 0))],
        out_specs=(pl.BlockSpec((tm, C), lambda i: (i, 0)),
                   pl.BlockSpec((2, C), lambda i: (0, 0))),
        scratch_shapes=[pltpu.VMEM((1, C), jnp.float32),
                        pltpu.VMEM((1, C), jnp.float32)],
        compiler_params=pltpu.CompilerParams(
            dimension_semantics=("arbitrary",),
            vmem_limit_bytes=_VMEM_LIMIT),
    )(patches)


def _avgpool_stats_kernel(p_ref, ic_ref, o_ref, st_ref, sum_ref, ssq_ref, *,
                          m_total, tm):
    i = pl.program_id(0)

    @pl.when(i == 0)
    def _():
        sum_ref[...] = jnp.zeros_like(sum_ref)
        ssq_ref[...] = jnp.zeros_like(ssq_ref)

    # count_include_pad=False average pooling; inv valid-tap counts precomputed.
    y = jnp.sum(p_ref[...].astype(jnp.float32), axis=0) * ic_ref[...]
    if m_total % tm:
        rows = jax.lax.broadcasted_iota(jnp.int32, y.shape, 0) + i * tm
        ym = jnp.where(rows < m_total, y, 0.0)
    else:
        ym = y
    sum_ref[...] += jnp.sum(ym, axis=0, keepdims=True)
    ssq_ref[...] += jnp.sum(ym * ym, axis=0, keepdims=True)
    o_ref[...] = y.astype(o_ref.dtype)

    @pl.when(i == pl.num_programs(0) - 1)
    def _():
        st_ref[0:1, :] = sum_ref[...]
        st_ref[1:2, :] = ssq_ref[...]


@jax.jit
def avgpool_stats_p(patches, inv_counts):
    KK, M, C = patches.shape
    tm = _row_tile(M, 2 * C * (KK + 1) + 4)
    nt = pl.cdiv(M, tm)
    kern = functools.partial(_avgpool_stats_kernel, m_total=M, tm=tm)
    return pl.pallas_call(
        kern,
        out_shape=(jax.ShapeDtypeStruct((M, C), jnp.bfloat16),
                   jax.ShapeDtypeStruct((2, C), jnp.float32)),
        grid=(nt,),
        in_specs=[
            pl.BlockSpec((KK, tm, C), lambda i: (0, i, 0)),
            pl.BlockSpec((tm, 1), lambda i: (i, 0)),
        ],
        out_specs=(pl.BlockSpec((tm, C), lambda i: (i, 0)),
                   pl.BlockSpec((2, C), lambda i: (0, 0))),
        scratch_shapes=[pltpu.VMEM((1, C), jnp.float32),
                        pltpu.VMEM((1, C), jnp.float32)],
        compiler_params=pltpu.CompilerParams(
            dimension_semantics=("arbitrary",),
            vmem_limit_bytes=_VMEM_LIMIT),
    )(patches, inv_counts)


def _wsum7_kernel(w_ref, x0, x1, x2, x3, x4, x5, x6, o_ref):
    # MixedOp: sum_k w[k] * op_k(x); w lives in SMEM (scalar prefetch).
    acc = w_ref[0] * x0[...].astype(jnp.float32)
    for idx, xr in enumerate((x1, x2, x3, x4, x5, x6), start=1):
        acc = acc + w_ref[idx] * xr[...].astype(jnp.float32)
    o_ref[...] = acc.astype(o_ref.dtype)


@jax.jit
def wsum7_p(w7, x0, x1, x2, x3, x4, x5, x6):
    M, C = x0.shape
    tm = _row_tile(M, 2 * C * 8)
    nt = pl.cdiv(M, tm)
    spec = pl.BlockSpec((tm, C), lambda i, w: (i, 0))
    return pl.pallas_call(
        _wsum7_kernel,
        out_shape=jax.ShapeDtypeStruct((M, C), jnp.bfloat16),
        grid_spec=pltpu.PrefetchScalarGridSpec(
            num_scalar_prefetch=1,
            grid=(nt,),
            in_specs=[spec] * 7,
            out_specs=spec,
        ),
        compiler_params=pltpu.CompilerParams(
            dimension_semantics=("parallel",),
            vmem_limit_bytes=_VMEM_LIMIT),
    )(w7, x0, x1, x2, x3, x4, x5, x6)


def _head_kernel(x_ref, w_ref, b_ref, o_ref, acc_ref, *, hw_total, thw):
    # global average pool over H*W (grid-tiled, per-batch partial sum), linear.
    i = pl.program_id(0)

    @pl.when(i == 0)
    def _():
        acc_ref[...] = jnp.zeros_like(acc_ref)

    x = x_ref[...].astype(jnp.float32)                      # (N, thw, C)
    if hw_total % thw:
        rows = jax.lax.broadcasted_iota(jnp.int32, x.shape, 1) + i * thw
        x = jnp.where(rows < hw_total, x, 0.0)
    acc_ref[...] += jnp.sum(x, axis=1)                      # (N, C)

    @pl.when(i == pl.num_programs(0) - 1)
    def _():
        pooled = acc_ref[...] * (1.0 / hw_total)
        o_ref[...] = jnp.dot(pooled, w_ref[...],
                             preferred_element_type=jnp.float32) + b_ref[...]


@jax.jit
def head_p(x3d, w, b):
    n, hw, c = x3d.shape
    nc = w.shape[1]
    thw = _row_tile(hw, 2 * n * c)
    nt = pl.cdiv(hw, thw)
    kern = functools.partial(_head_kernel, hw_total=hw, thw=thw)
    return pl.pallas_call(
        kern,
        out_shape=jax.ShapeDtypeStruct((n, nc), jnp.float32),
        grid=(nt,),
        in_specs=[
            pl.BlockSpec((n, thw, c), lambda i: (0, i, 0)),
            pl.BlockSpec((c, nc), lambda i: (0, 0)),
            pl.BlockSpec((1, nc), lambda i: (0, 0)),
        ],
        out_specs=pl.BlockSpec((n, nc), lambda i: (0, 0)),
        scratch_shapes=[pltpu.VMEM((n, c), jnp.float32)],
        compiler_params=pltpu.CompilerParams(
            dimension_semantics=("arbitrary",),
            vmem_limit_bytes=_VMEM_LIMIT),
    )(x3d, w, b)


def _mm_kernel(a_ref, b_ref, o_ref):
    o_ref[...] = jnp.dot(a_ref[...], b_ref[...],
                         preferred_element_type=jnp.float32)


@jax.jit
def mm_small_p(a, b):
    """Tiny single-block matmul (alpha projection)."""
    M = a.shape[0]
    N = b.shape[1]
    return pl.pallas_call(
        _mm_kernel, out_shape=jax.ShapeDtypeStruct((M, N), jnp.float32)
    )(a.astype(jnp.float32), b.astype(jnp.float32))


# ----------------------------------------------------------------------------
# JAX glue: im2col, analytic pool counts, layer building blocks
# ----------------------------------------------------------------------------

def extract_patch_cols(x, k, stride, pad, dil):
    """x: [N,H,W,C] -> im2col cols [N*Ho*Wo, k*k*C] (tap-major, channel-minor)."""
    N, H, W, C = x.shape
    eff = dil * (k - 1) + 1
    Ho = (H + 2 * pad - eff) // stride + 1
    Wo = (W + 2 * pad - eff) // stride + 1
    xp = jnp.pad(x, ((0, 0), (pad, pad), (pad, pad), (0, 0)))
    taps = []
    for kh in range(k):
        for kw in range(k):
            taps.append(xp[:, kh * dil: kh * dil + stride * (Ho - 1) + 1: stride,
                              kw * dil: kw * dil + stride * (Wo - 1) + 1: stride, :])
    cols = jnp.stack(taps, axis=3).reshape(N * Ho * Wo, k * k * C)
    return cols, Ho, Wo


def extract_patches_taps(x, k, stride, pad, dil, pad_value=0.0):
    """x: [N,H,W,C] -> [k*k, N*Ho*Wo, C] (for pooling tap reductions)."""
    N, H, W, C = x.shape
    eff = dil * (k - 1) + 1
    Ho = (H + 2 * pad - eff) // stride + 1
    Wo = (W + 2 * pad - eff) // stride + 1
    xp = jnp.pad(x, ((0, 0), (pad, pad), (pad, pad), (0, 0)),
                 constant_values=pad_value)
    pats = []
    for kh in range(k):
        for kw in range(k):
            sl = xp[:, kh * dil: kh * dil + stride * (Ho - 1) + 1: stride,
                       kw * dil: kw * dil + stride * (Wo - 1) + 1: stride, :]
            pats.append(sl.reshape(N * Ho * Wo, C))
    return jnp.stack(pats, axis=0), Ho, Wo


@functools.lru_cache(maxsize=None)
def _avg_inv_counts(N, H, W, stride):
    """Analytic 1/valid-tap-count for 3x3/pad=1 avg pool (count_include_pad=False)."""
    Ho = (H + 2 - 3) // stride + 1
    Wo = (W + 2 - 3) // stride + 1

    def cnt(L, Lo):
        base = np.arange(Lo) * stride - 1
        c = np.zeros(Lo, np.float32)
        for d in range(3):
            c += ((base + d >= 0) & (base + d < L)).astype(np.float32)
        return c

    ch, cw = cnt(H, Ho), cnt(W, Wo)
    inv = 1.0 / (ch[:, None] * cw[None, :])
    inv = np.broadcast_to(inv[None], (N, Ho, Wo)).reshape(N * Ho * Wo, 1)
    return jnp.asarray(np.ascontiguousarray(inv), jnp.float32)


def relu_conv_bn(x, w):                # ReLUConvBN(Cin, Cout, 1, 1, 0, affine=False)
    N, H, W, C = x.shape
    y = mm_bn_p(x.reshape(N * H * W, C), w, apply_relu=True)
    return y.reshape(N, H, W, w.shape[1])


def factorized_reduce(x, w_fr):        # FactorizedReduce(Cin, Cout, affine=False)
    # w_fr is block-diagonal [[w1, 0], [0, w2]] : (2*Cin, Cout); relu is fused.
    N, H, W, C = x.shape
    a1 = x[:, ::2, ::2, :]
    a2 = x[:, 1::2, 1::2, :]
    Ho, Wo = a1.shape[1], a1.shape[2]
    cols = jnp.concatenate([a1.reshape(-1, C), a2.reshape(-1, C)], axis=1)
    y = mm_bn_p(cols, w_fr, apply_relu=True)
    return y.reshape(N, Ho, Wo, w_fr.shape[1])


def sep_conv(x, ws, k, stride, pad):   # SepConv(C, C, k, stride, pad, affine=False)
    # ws = (W1, W2): fused depthwise*pointwise weights, each (k*k*C, C) bf16.
    W1, W2 = ws
    N, H, W_, C = x.shape
    cols, Ho, Wo = extract_patch_cols(x, k, stride, pad, 1)
    y, st = mm_stats_p(cols, W1, apply_relu=True)    # relu + dw + pw, one matmul
    y = bn_apply_p(y, st)                            # BN normalize
    cols2, Ho2, Wo2 = extract_patch_cols(y.reshape(N, Ho, Wo, C), k, 1, pad, 1)
    y2, st2 = mm_stats_p(cols2, W2, apply_relu=True)
    y2 = bn_apply_p(y2, st2)
    return y2.reshape(N, Ho2, Wo2, C)


def dil_conv(x, w_big, k, stride, pad, dil):   # DilConv(C, C, k, stride, pad, dil)
    N, H, W_, C = x.shape
    cols, Ho, Wo = extract_patch_cols(x, k, stride, pad, dil)
    y, st = mm_stats_p(cols, w_big, apply_relu=True)
    y = bn_apply_p(y, st)
    return y.reshape(N, Ho, Wo, C)


def maxpool_bn(x, stride):
    pats, Ho, Wo = extract_patches_taps(x, 3, stride, 1, 1, pad_value=-jnp.inf)
    y, st = maxpool_stats_p(pats)
    return bn_apply_p(y, st)


def avgpool_bn(x, stride):
    N, H, W, C = x.shape
    pats, Ho, Wo = extract_patches_taps(x, 3, stride, 1, 1, pad_value=0.0)
    y, st = avgpool_stats_p(pats, _avg_inv_counts(N, H, W, stride))
    return bn_apply_p(y, st)


def mixed_sum(w7, branches):
    """Lane-dense weighted sum of the 7 branch maps (pure elementwise)."""
    M, C = branches[0].shape
    total = M * C
    L = next((l for l in (1024, 512, 256, 128) if total % l == 0), None)
    if L is not None:
        xs = [b.reshape(total // L, L) for b in branches]
    else:
        xs = branches          # fallback: per-channel layout (masked stores)
    y = wsum7_p(w7, *xs)
    return y.reshape(M, C)


# ----------------------------------------------------------------------------
# MixedOp / Cell / NetWork forward
# ----------------------------------------------------------------------------

def mixed_op(edge, x, w8):
    """w8: length-8 weights in PRIMITIVES order.  'none' contributes exact
    zeros regardless of its weight, so it is skipped (identical result)."""
    stride = edge["stride"]
    N, H, W, C = x.shape
    Ho = (H + 2 - 3) // stride + 1
    Wo = (W + 2 - 3) // stride + 1
    if stride == 1:
        skip = x.reshape(N * H * W, C)
    else:
        skip = factorized_reduce(x, edge["skip_fr"]).reshape(N * Ho * Wo, C)
    branches = [
        maxpool_bn(x, stride),                                  # max_pool_3x3+BN
        avgpool_bn(x, stride),                                  # avg_pool_3x3+BN
        skip,                                                   # skip_connect
        sep_conv(x, edge["sep3"], 3, stride, 1).reshape(-1, C),
        sep_conv(x, edge["sep5"], 5, stride, 2).reshape(-1, C),
        dil_conv(x, edge["dil3"], 3, stride, 2, 2).reshape(-1, C),
        dil_conv(x, edge["dil5"], 5, stride, 4, 2).reshape(-1, C),
    ]
    y = mixed_sum(w8[1:], branches)
    return y.reshape(N, Ho, Wo, C)


def cell_forward(cell, s0, s1, weights, steps, multiplier):
    if cell["reduction_prev"]:
        s0 = factorized_reduce(s0, cell["pre0_fr"])
    else:
        s0 = relu_conv_bn(s0, cell["pre0_w"])
    s1 = relu_conv_bn(s1, cell["pre1_w"])
    states = [s0, s1]
    offset = 0
    for _ in range(steps):
        s = None
        for j, h in enumerate(states):
            contrib = mixed_op(cell["edges"][offset + j], h, weights[offset + j])
            s = contrib if s is None else s + contrib
        offset += len(states)
        states.append(s)
    return jnp.concatenate(states[-multiplier:], axis=-1)


def proj_alphas(alphas_, A_blk, bias):
    # single block-diagonal matmul == per-step alphas_[i] @ A_i, concatenated.
    t = mm_small_p(alphas_.reshape(1, -1), A_blk)
    return t.reshape(-1, len(PRIMITIVES)) - bias


def network_forward(params, x_nchw):
    cfg = params["cfg"]
    steps, multiplier = cfg["steps"], cfg["multiplier"]
    x = jnp.transpose(x_nchw, (0, 2, 3, 1)).astype(jnp.bfloat16)  # NCHW -> NHWC

    # stem: conv 3x3 (im2col + fused matmul+BN; affine w=1/b=0 == plain BN)
    cols, Ho, Wo = extract_patch_cols(x, 3, 1, 1, 1)
    s = mm_bn_p(cols, params["stem_w"], apply_relu=False)
    s0 = s1 = s.reshape(x.shape[0], Ho, Wo, params["stem_w"].shape[1])

    alphas_normal = proj_alphas(params["alphas_normal_"], params["A_normal_blk"],
                                params["normal_bias"])
    alphas_reduce = proj_alphas(params["alphas_reduce_"], params["A_reduce_blk"],
                                params["reduce_bias"])

    for cell in params["cells"]:
        weights = alphas_reduce if cell["reduction"] else alphas_normal
        s0, s1 = s1, cell_forward(cell, s0, s1, weights, steps, multiplier)

    N, H, W, C = s1.shape
    return head_p(s1.reshape(N, H * W, C), params["cls_w"], params["cls_b"])


# ----------------------------------------------------------------------------
# Deterministic parameter initialization (synthetic; no checkpoint loading)
# ----------------------------------------------------------------------------

def _blockdiag(ws):
    rows = sum(w.shape[0] for w in ws)
    cols = sum(w.shape[1] for w in ws)
    out = jnp.zeros((rows, cols), jnp.float32)
    r = c = 0
    for w in ws:
        out = out.at[r:r + w.shape[0], c:c + w.shape[1]].set(w)
        r += w.shape[0]
        c += w.shape[1]
    return out


def _fuse_dw_pw(dw, pw):
    """W[(k,ci),co] = dw[k,ci] * pw[ci,co]  ->  (k*k*C, Cout) bf16."""
    KK, C = dw.shape
    return (dw[:, :, None] * pw[None, :, :]).reshape(KK * C,
                                                     pw.shape[1]).astype(jnp.bfloat16)


def init_params(key, C, num_classes, layers, proj_dims, steps, multiplier,
                stem_multiplier):
    ctr = itertools.count()

    def rnd(shape, scale=0.1):
        return (scale * jax.random.normal(jax.random.fold_in(key, next(ctr)),
                                          shape)).astype(jnp.float32)

    def bf(x):
        return x.astype(jnp.bfloat16)

    def fr_w(cin, cout):  # block-diag FactorizedReduce weight (2*cin, cout), bf16
        return bf(_blockdiag([rnd((cin, cout // 2)), rnd((cin, cout // 2))]))

    P = len(PRIMITIVES)
    params = {"cfg": dict(C=C, num_classes=num_classes, layers=layers,
                          proj_dims=proj_dims, steps=steps,
                          multiplier=multiplier, stem_multiplier=stem_multiplier)}
    C_curr = stem_multiplier * C
    params["stem_w"] = bf(rnd((27, C_curr)))          # 3x3 conv, Cin=3 -> 27 rows
    C_pp, C_p, C_curr = C_curr, C_curr, C
    cells = []
    reduction_prev = False
    for i in range(layers):
        reduction = i in (layers // 3, 2 * layers // 3)
        if reduction:
            C_curr *= 2
        cell = {"reduction": reduction, "reduction_prev": reduction_prev}
        if reduction_prev:
            cell["pre0_fr"] = fr_w(C_pp, C_curr)
        else:
            cell["pre0_w"] = bf(rnd((C_pp, C_curr)))
        cell["pre1_w"] = bf(rnd((C_p, C_curr)))
        edges = []
        for si in range(steps):
            for j in range(2 + si):
                stride = 2 if reduction and j < 2 else 1
                Cc = C_curr
                e = {"stride": stride}
                if stride != 1:
                    e["skip_fr"] = fr_w(Cc, Cc)
                e["sep3"] = (_fuse_dw_pw(rnd((9, Cc)), rnd((Cc, Cc))),
                             _fuse_dw_pw(rnd((9, Cc)), rnd((Cc, Cc))))
                e["sep5"] = (_fuse_dw_pw(rnd((25, Cc)), rnd((Cc, Cc))),
                             _fuse_dw_pw(rnd((25, Cc)), rnd((Cc, Cc))))
                e["dil3"] = _fuse_dw_pw(rnd((9, Cc)), rnd((Cc, Cc)))
                e["dil5"] = _fuse_dw_pw(rnd((25, Cc)), rnd((Cc, Cc)))
                edges.append(e)
        cell["edges"] = edges
        cells.append(cell)
        reduction_prev = reduction
        C_pp, C_p = C_p, multiplier * C_curr
    params["cells"] = cells
    params["cls_w"] = rnd((C_p, num_classes))
    params["cls_b"] = jnp.zeros((1, num_classes), jnp.float32)
    num_edges = sum(2 + i for i in range(steps))
    params["alphas_normal_"] = rnd((steps, proj_dims), 0.001)
    params["alphas_reduce_"] = rnd((steps, proj_dims), 0.001)
    params["A_normal_blk"] = _blockdiag(
        [rnd((proj_dims, (2 + i) * P), 1.0) for i in range(steps)])
    params["A_reduce_blk"] = _blockdiag(
        [rnd((proj_dims, (2 + i) * P), 1.0) for i in range(steps)])
    params["normal_bias"] = rnd((num_edges, P), 0.001)
    params["reduce_bias"] = rnd((num_edges, P), 0.001)
    return params


# ----------------------------------------------------------------------------

if __name__ == "__main__":
    # small config: C=4, 3 layers (cells 1 and 2 are reduction cells, cell 2 has
    # a FactorizedReduce preprocess), steps=2, multiplier=2, CIFAR-like input.
    C, num_classes, layers = 4, 10, 3
    proj_dims, steps, multiplier, stem_multiplier = 2, 2, 2, 3

    key = jax.random.PRNGKey(0)
    params = init_params(key, C, num_classes, layers, proj_dims, steps,
                         multiplier, stem_multiplier)
    x = jax.random.normal(jax.random.fold_in(key, 12345), (2, 3, 16, 16),
                          jnp.float32)

    logits = network_forward(params, x)
    logits = jax.block_until_ready(logits)

    assert logits.shape == (2, num_classes), logits.shape
    assert bool(jnp.all(jnp.isfinite(logits)))
    print("KERNEL_OK")
</pallas_src>

<mosaic_0001>
module attributes {stable_mosaic.version = 11 : i64} {
  func.func @_mm_bn_kernel(%arg0: i32, %arg1: i32, %arg2: memref<512x27xbf16, #tpu.memory_space<vmem>>, %arg3: memref<27x12xbf16, #tpu.memory_space<vmem>>, %arg4: memref<512x12xbf16, #tpu.memory_space<vmem>>, %arg5: memref<1x12xf32, #tpu.memory_space<vmem>>, %arg6: memref<1x12xf32, #tpu.memory_space<vmem>>) attributes {dimension_semantics = [#tpu.dimension_semantics<arbitrary>, #tpu.dimension_semantics<arbitrary>], iteration_bounds = array<i64: 2, 1>, scalar_prefetch = 0 : i64, scratch_operands = 2 : i64, tpu.core_type = #tpu.core_type<tc>, window_params = [{transform_indices = @transform_0, window_bounds = array<i64: 512, 27>}, {pipeline_mode = #tpu.pipeline_mode<synchronous>, transform_indices = @transform_1, window_bounds = array<i64: 27, 12>}, {transform_indices = @transform_2, window_bounds = array<i64: 512, 12>}]} {
    %c0_i32 = arith.constant 0 : i32
    %0 = arith.cmpi eq, %arg0, %c0_i32 : i32
    %c0_i32_0 = arith.constant 0 : i32
    %1 = arith.cmpi eq, %arg1, %c0_i32_0 : i32
    %2 = arith.andi %0, %1 : i1
    %3 = arith.extui %2 : i1 to i32
    %c0_i32_1 = arith.constant 0 : i32
    %4 = arith.cmpi ne, %3, %c0_i32_1 : i32
    scf.if %4 {
      %cst_8 = arith.constant 0.000000e+00 : f32
      %14 = vector.broadcast %cst_8 : f32 to vector<1x12xf32>
      %c0_9 = arith.constant 0 : index
      %c0_10 = arith.constant 0 : index
      %15 = vector.load %arg5[%c0_9, %c0_10] : memref<1x12xf32, #tpu.memory_space<vmem>>, vector<1x12xf32>
      tpu.vector_store %arg5[%c0_9, %c0_10], %14 {strides = array<i32>} : memref<1x12xf32, #tpu.memory_space<vmem>>, vector<1x12xf32>,
      %cst_11 = arith.constant 0.000000e+00 : f32
      %16 = vector.broadcast %cst_11 : f32 to vector<1x12xf32>
      %c0_12 = arith.constant 0 : index
      %c0_13 = arith.constant 0 : index
      %17 = vector.load %arg6[%c0_12, %c0_13] : memref<1x12xf32, #tpu.memory_space<vmem>>, vector<1x12xf32>
      tpu.vector_store %arg6[%c0_12, %c0_13], %16 {strides = array<i32>} : memref<1x12xf32, #tpu.memory_space<vmem>>, vector<1x12xf32>,
    } else {
    }
    %c0 = arith.constant 0 : index
    %c0_2 = arith.constant 0 : index
    %5 = vector.load %arg2[%c0, %c0_2] : memref<512x27xbf16, #tpu.memory_space<vmem>>, vector<512x27xbf16>
    %c0_3 = arith.constant 0 : index
    %c0_4 = arith.constant 0 : index
    %6 = vector.load %arg3[%c0_3, %c0_4] : memref<27x12xbf16, #tpu.memory_space<vmem>>, vector<27x12xbf16>
    %cst = arith.constant dense<0.000000e+00> : vector<512x12xf32>
    %7 = tpu.matmul %5, %6, %cst {dimension_numbers = #tpu.dot_dimension_numbers<[1], [0], [0], [1], [0, 0, 1, 1], [], []>} : vector<512x27xbf16>, vector<27x12xbf16>, vector<512x12xf32> -> vector<512x12xf32>
    %c0_i32_5 = arith.constant 0 : i32
    %8 = arith.cmpi eq, %arg0, %c0_i32_5 : i32
    %9 = arith.extui %8 : i1 to i32
    %c0_i32_6 = arith.constant 0 : i32
    %10 = arith.cmpi ne, %9, %c0_i32_6 : i32
    scf.if %10 {
      %c0_8 = arith.constant 0 : index
      %c0_9 = arith.constant 0 : index
      %14 = vector.load %arg5[%c0_8, %c0_9] : memref<1x12xf32, #tpu.memory_space<vmem>>, vector<1x12xf32>
      %cst_10 = arith.constant dense<0.000000e+00> : vector<12xf32>
      %15 = vector.multi_reduction <add>, %7, %cst_10 [0] : vector<512x12xf32> to vector<12xf32>
      %16 = vector.shape_cast %15 : vector<12xf32> to vector<1x12xf32>
      %17 = arith.addf %14, %16 : vector<1x12xf32>
      %c0_11 = arith.constant 0 : index
      %c0_12 = arith.constant 0 : index
      %18 = vector.load %arg5[%c0_11, %c0_12] : memref<1x12xf32, #tpu.memory_space<vmem>>, vector<1x12xf32>
      tpu.vector_store %arg5[%c0_11, %c0_12], %17 {strides = array<i32>} : memref<1x12xf32, #tpu.memory_space<vmem>>, vector<1x12xf32>,
      %c0_13 = arith.constant 0 : index
      %c0_14 = arith.constant 0 : index
      %19 = vector.load %arg6[%c0_13, %c0_14] : memref<1x12xf32, #tpu.memory_space<vmem>>, vector<1x12xf32>
      %20 = arith.mulf %7, %7 : vector<512x12xf32>
      %cst_15 = arith.constant dense<0.000000e+00> : vector<12xf32>
      %21 = vector.multi_reduction <add>, %20, %cst_15 [0] : vector<512x12xf32> to vector<12xf32>
      %22 = vector.shape_cast %21 : vector<12xf32> to vector<1x12xf32>
      %23 = arith.addf %19, %22 : vector<1x12xf32>
      %c0_16 = arith.constant 0 : index
      %c0_17 = arith.constant 0 : index
      %24 = vector.load %arg6[%c0_16, %c0_17] : memref<1x12xf32, #tpu.memory_space<vmem>>, vector<1x12xf32>
      tpu.vector_store %arg6[%c0_16, %c0_17], %23 {strides = array<i32>} : memref<1x12xf32, #tpu.memory_space<vmem>>, vector<1x12xf32>,
    } else {
    }
    %c1_i32 = arith.constant 1 : i32
    %11 = arith.cmpi eq, %arg0, %c1_i32 : i32
    %12 = arith.extui %11 : i1 to i32
    %c0_i32_7 = arith.constant 0 : i32
    %13 = arith.cmpi ne, %12, %c0_i32_7 : i32
    scf.if %13 {
      %c0_8 = arith.constant 0 : index
      %c0_9 = arith.constant 0 : index
      %14 = vector.load %arg5[%c0_8, %c0_9] : memref<1x12xf32, #tpu.memory_space<vmem>>, vector<1x12xf32>
      %cst_10 = arith.constant 0.001953125 : f32
      %15 = vector.broadcast %cst_10 : f32 to vector<1x12xf32>
      %16 = arith.mulf %14, %15 : vector<1x12xf32>
      %c0_11 = arith.constant 0 : index
      %c0_12 = arith.constant 0 : index
      %17 = vector.load %arg6[%c0_11, %c0_12] : memref<1x12xf32, #tpu.memory_space<vmem>>, vector<1x12xf32>
      %cst_13 = arith.constant 0.001953125 : f32
      %18 = vector.broadcast %cst_13 : f32 to vector<1x12xf32>
      %19 = arith.mulf %17, %18 : vector<1x12xf32>
      %20 = arith.mulf %16, %16 : vector<1x12xf32>
      %21 = arith.subf %19, %20 : vector<1x12xf32>
      %cst_14 = arith.constant 0.000000e+00 : f32
      %22 = vector.broadcast %cst_14 : f32 to vector<1x12xf32>
      %23 = arith.maximumf %21, %22 : vector<1x12xf32>
      %24 = vector.broadcast %16 : vector<1x12xf32> to vector<512x12xf32>
      %25 = arith.subf %7, %24 : vector<512x12xf32>
      %cst_15 = arith.constant 9.99999974E-6 : f32
      %26 = vector.broadcast %cst_15 : f32 to vector<1x12xf32>
      %27 = arith.addf %23, %26 : vector<1x12xf32>
      %28 = math.rsqrt %27 : vector<1x12xf32>
      %29 = vector.broadcast %28 : vector<1x12xf32> to vector<512x12xf32>
      %30 = arith.mulf %25, %29 : vector<512x12xf32>
      %31 = arith.truncf %30 : vector<512x12xf32> to vector<512x12xbf16>
      %c0_16 = arith.constant 0 : index
      %c0_17 = arith.constant 0 : index
      %32 = vector.load %arg4[%c0_16, %c0_17] : memref<512x12xbf16, #tpu.memory_space<vmem>>, vector<512x12xbf16>
      tpu.vector_store %arg4[%c0_16, %c0_17], %31 {strides = array<i32>} : memref<512x12xbf16, #tpu.memory_space<vmem>>, vector<512x12xbf16>,
    } else {
    }
    return
  }
  func.func @transform_0(%arg0: i32, %arg1: i32) -> (i32, i32) {
    %c0_i32 = arith.constant 0 : i32
    %c0_i32_0 = arith.constant 0 : i32
    return %arg1, %c0_i32 : i32, i32
  }
  func.func @transform_1(%arg0: i32, %arg1: i32) -> (i32, i32) {
    %c0_i32 = arith.constant 0 : i32
    %c0_i32_0 = arith.constant 0 : i32
    %c0_i32_1 = arith.constant 0 : i32
    return %c0_i32, %c0_i32_0 : i32, i32
  }
  func.func @transform_2(%arg0: i32, %arg1: i32) -> (i32, i32) {
    %0 = arith.muli %arg1, %arg0 : i32
    %c0_i32 = arith.constant 0 : i32
    %c0_i32_0 = arith.constant 0 : i32
    return %0, %c0_i32 : i32, i32
  }
}

</mosaic_0001>

<llo_original>
// kernel: mm_bn_p.1
$region0: #{mm_bn_p.1}
  #allocation0 [shape = 'u32[]', space=smem, size = 0x4, offset = 0x4, fixed_abs, tag = 'smem constant byte address 0x4 - core index']
  #allocation1 [shape = 'u32[72,128]{1,0:T(1,128)}', space=vmem, size = 0x9000, scoped, tag = 'internal scratch']
  #allocation2 [shape = 'f32[1,12]{1,0:T(1,128)}', space=vmem, size = 0x200, scoped, tag = 'scratch operand']
  #allocation3 [shape = 'f32[1,12]{1,0:T(1,128)}', space=vmem, size = 0x200, scoped, tag = 'scratch operand']
  %s0 = inlined_call_operand.vmem [shape: bf16[512,27], index: 0, kind: input, shape index: {}]
  %s1 = inlined_call_operand.vmem [shape: bf16[27,12], index: 1, kind: input, shape index: {}]
  %s2 = inlined_call_operand.vmem [shape: bf16[512,12], index: 2, kind: output, shape index: {}]
  %s3 = sld [smem:[#allocation0]]
  $region53: #{mm_bn_p.1} parent=0
    _
  %s5 = ssub.s32 1, %s3
  %s6 = scalar_select 0, %s5, %s3
  loop: start=0, step=1, limit=4
  $region2: #{mm_bn_p.1} parent=0 // loop_pre_header
    _
  $region3: #{mm_bn_p.1} parent=0 // loop_header
    %s8 = sphi 0, %s12
    %p9 = scmp.ge.s32.totalorder %s8, 4
    %s15 = sphi 0, %s27
    %s16 = sphi 0, %s23
    %s17 = sphi 0, %s15
    %s18 = sphi 0, %s16
    %s19 = sphi 0, %s17
    %s20 = sphi 0, %s18
    %s30 = sphi 0, %s32
    %s33 = sphi 0, %s30
    %s34 = sphi 0, %s33
    %s50 = sphi 0, %s34
    %s54 = sphi 0, %s54
    %s56 = sphi 0, %s54
    %s57 = sphi 0, %s56
    %s71 = sphi 0, %s57
    %s79 = sphi 0, %s81
    %s82 = sphi 0, %s79
    %s83 = sphi 0, %s82
    %s99 = sphi 0, %s83
  $region4: #{mm_bn_p.1} parent=0 // loop_header_branch
    %11 = sbr.rel (%p9) target = $region8
  $region5: #{mm_bn_p.1} parent=0 // loop_body
    %s13 = ssub.s32 %s8, 1
    %s14 = ssub.s32 %s8, 2
    %s21 = sadd.s32 1, %s16
    %p22 = scmp.ge.s32.totalorder %s21, 1
    %s23 = scalar_select %p22, 0, %s21
    %s24 = sadd.s32 1, %s15
    %s25 = scalar_select %p22, %s24, %s15
    %p26 = scmp.ge.s32.totalorder %s25, 2
    %s27 = scalar_select %p26, 0, %s25
    %s28 = ssub.s32 %s16, %s23
    %p29 = scmp.eq.s32.totalorder %s28, 0
    %s31 = sadd.s32 %s30, 1
    %s32 = scalar_select %p29, %s30, %s31
    %p35 = pneg %p29
    %p36 = scmp.eq.s32.totalorder %s8, 1
    %p37 = por %p35, %p36
    %p38 = scmp.ne.s32.totalorder %s30, %s33
    %p39 = scmp.eq.s32.totalorder %s8, 0
    %p40 = por %p38, %p39
    %p41 = scmp.ne.s32.totalorder %s30, %s33
    %p42 = scmp.eq.s32.totalorder %s13, 1
    %p43 = por %p41, %p42
    %p44 = scmp.ne.s32.totalorder %s33, %s34
    %p45 = scmp.eq.s32.totalorder %s13, 0
    %p46 = por %p44, %p45
    %p47 = scmp.ne.s32.totalorder %s33, %s34
    %p48 = scmp.eq.s32.totalorder %s14, 1
    %p49 = por %p47, %p48
    %p51 = scmp.ne.s32.totalorder %s34, %s50
    %p52 = scmp.eq.s32.totalorder %s14, 0
    %p53 = por %p51, %p52
    %s55 = sadd.s32 %s54, 1
    %p58 = scmp.eq.s32.totalorder %s8, 1
    %p59 = scmp.ne.s32.totalorder %s54, %s56
    %p60 = scmp.eq.s32.totalorder %s8, 0
    %p61 = por %p59, %p60
    %p62 = scmp.ne.s32.totalorder %s54, %s56
    %p63 = scmp.eq.s32.totalorder %s13, 1
    %p64 = por %p62, %p63
    %p65 = scmp.ne.s32.totalorder %s56, %s57
    %p66 = scmp.eq.s32.totalorder %s13, 0
    %p67 = por %p65, %p66
    %p68 = scmp.ne.s32.totalorder %s56, %s57
    %p69 = scmp.eq.s32.totalorder %s14, 1
    %p70 = por %p68, %p69
    %p72 = scmp.ne.s32.totalorder %s57, %s71
    %p73 = scmp.eq.s32.totalorder %s14, 0
    %p74 = por %p72, %p73
    %s75 = smul.u32 %s16, %s15
    %s76 = smul.u32 %s23, %s27
    %s77 = ssub.s32 %s75, %s76
    %p78 = scmp.eq.s32.totalorder %s77, 0
    %s80 = sadd.s32 %s79, 1
    %s81 = scalar_select %p78, %s79, %s80
    %p84 = pneg %p78
    %p85 = scmp.eq.s32.totalorder %s8, 1
    %p86 = por %p84, %p85
    %p87 = scmp.ne.s32.totalorder %s79, %s82
    %p88 = scmp.eq.s32.totalorder %s8, 0
    %p89 = por %p87, %p88
    %p90 = scmp.ne.s32.totalorder %s79, %s82
    %p91 = scmp.eq.s32.totalorder %s13, 1
    %p92 = por %p90, %p91
    %p93 = scmp.ne.s32.totalorder %s82, %s83
    %p94 = scmp.eq.s32.totalorder %s13, 0
    %p95 = por %p93, %p94
    %p96 = scmp.ne.s32.totalorder %s82, %s83
    %p97 = scmp.eq.s32.totalorder %s14, 1
    %p98 = por %p96, %p97
    %p100 = scmp.ne.s32.totalorder %s83, %s99
    %p101 = scmp.eq.s32.totalorder %s14, 0
    %p102 = por %p100, %p101
    %p103 = scmp.le.s32.totalorder 1, %s8
    %p104 = scmp.lt.s32.totalorder %s8, 3
    %p105 = pnand %p103, %p104
    %p106 = pneg %p105
    // Predicated region
    $region9: #{mm_bn_p.1} parent=5 // pred_check
      _
    $region10: #{mm_bn_p.1} parent=5 // pred_check_branch
      %108 = sbr.rel (%p105) target = $region12
    $region11: #{mm_bn_p.1} parent=5 // pred_region
      %s109 = ssub.s32 %s8, 1
      // Predicated region
      $region13: #{mm_bn_p.1} parent=11 // pred_check
        %p110 = pneg %p46
      $region14: #{mm_bn_p.1} parent=11 // pred_check_branch
        %112 = sbr.rel (%p110) target = $region16
      $region15: #{mm_bn_p.1} parent=11 // pred_region
        %s113 = smul.u32 64, %s18
        %p114 = scmp.lt.s32.totalorder %s113, 63
        %s115 = scalar_select %p114, %s113, 63
        %s116 = smul.addr %s115, 4
        %s117 = scalar_lea.vmem %s0, %s116
        %s118 = smul.u32 64, %s18
      $region16: #{mm_bn_p.1} parent=11 // pred_fallthru
        _
      // Predicated region
      $region17: #{mm_bn_p.1} parent=11 // pred_check
        %p119 = pneg %p67
      $region18: #{mm_bn_p.1} parent=11 // pred_check_branch
        %121 = sbr.rel (%p119) target = $region20
      $region19: #{mm_bn_p.1} parent=11 // pred_region
        _
      $region20: #{mm_bn_p.1} parent=11 // pred_fallthru
        _
    $region12: #{mm_bn_p.1} parent=5 // pred_fallthru
      _
    %p122 = scmp.lt.s32.totalorder %s8, 2
    // Predicated region
    $region21: #{mm_bn_p.1} parent=5 // pred_check
      %p123 = pneg %p122
    $region22: #{mm_bn_p.1} parent=5 // pred_check_branch
      %125 = sbr.rel (%p123) target = $region24
    $region23: #{mm_bn_p.1} parent=5 // pred_region
      _
    $region24: #{mm_bn_p.1} parent=5 // pred_fallthru
      _
    %p126 = scmp.le.s32.totalorder 1, %s8
    %p127 = scmp.lt.s32.totalorder %s8, 3
    %p128 = pnand %p126, %p127
    %p129 = pneg %p128
    // Predicated region
    $region25: #{mm_bn_p.1} parent=5 // pred_check
      _
    $region26: #{mm_bn_p.1} parent=5 // pred_check_branch
      %131 = sbr.rel (%p128) target = $region28
    $region27: #{mm_bn_p.1} parent=5 // pred_region
      %s132 = ssub.s32 %s8, 1
      %s133 = smul.u32 64, %s18
      %p134 = scmp.lt.s32.totalorder %s133, 63
      %s135 = scalar_select %p134, %s133, 63
      %s136 = smul.addr %s135, 4
      %s137 = scalar_lea.vmem %s0, %s136
      %p138 = pneg %p46
      %p139 = pneg %p43
      %p140 = pneg %p67
      %p141 = pneg %p64
      %p142 = pneg %p95
      %p143 = pneg %p92
      %s144 = smul.u32 %s18, %s17
      %s145 = smul.u32 64, %s144
      %p146 = scmp.lt.s32.totalorder %s145, 63
      %s147 = scalar_select %p146, %s145, 63
      %s148 = smul.addr %s147, 4
      %s149 = scalar_lea.vmem %s2, %s148
      %s150 = smul.u32 64, %s18
      %p151 = scmp.lt.s32.totalorder %s150, 63
      %s152 = scalar_select %p151, %s150, 63
      %s153 = smul.addr %s152, 4
      %s154 = scalar_lea.vmem %s0, %s153
      %s155 = smul.u32 64, %s18
      %s156 = smul.u32 %s18, %s17
      %s157 = smul.u32 64, %s156
      %p158 = scmp.lt.s32.totalorder %s157, 63
      %s159 = scalar_select %p158, %s157, 63
      %s160 = smul.addr %s159, 4
      %s161 = scalar_lea.vmem %s2, %s160
      %s162 = smul.u32 %s18, %s17
      %s163 = smul.u32 64, %s162
      %p165 = scmp.eq.s32.totalorder %s17, 0
      %p166 = scmp.eq.s32.totalorder %s18, 0
      %p167 = pnand %p165, %p166
      %p168 = pneg %p167
      // Predicated region
      $region29: #{mm_bn_p.1} parent=27 // pred_check
        _
      $region30: #{mm_bn_p.1} parent=27 // pred_check_branch
        %170 = sbr.rel (%p167) target = $region32
      $region31: #{mm_bn_p.1} parent=27 // pred_region
        %vm171 = vcmask 90112
        %172 = vst.msk [vmem:[#allocation2] sm:$0x1] %vm171, 0.0
        %173 = vst.msk [vmem:[#allocation3] sm:$0x1] %vm171, 0.0
      $region32: #{mm_bn_p.1} parent=27 // pred_fallthru
        _
      %v174 = vld [vmem:[%s154] sm:$0xf]
      %v175 = vld [vmem:[%s154 + $0x4] sm:$0xf]
      %v176 = vld [vmem:[%s154 + $0x8] sm:$0xf]
      %v177 = vld [vmem:[%s154 + $0xc] sm:$0xf]
      %v178 = vld [vmem:[%s154 + $0x10] sm:$0xf]
      %v179 = vld [vmem:[%s154 + $0x14] sm:$0xf]
      %v180 = vld [vmem:[%s154 + $0x18] sm:$0xf]
      %v181 = vld [vmem:[%s154 + $0x1c] sm:$0xf]
      %v182 = vld [vmem:[%s154 + $0x20] sm:$0xf]
      %v183 = vld [vmem:[%s154 + $0x24] sm:$0xf]
      %v184 = vld [vmem:[%s154 + $0x28] sm:$0xf]
      %v185 = vld [vmem:[%s154 + $0x2c] sm:$0xf]
      %v186 = vld [vmem:[%s154 + $0x30] sm:$0xf]
      %v187 = vld [vmem:[%s154 + $0x34] sm:$0xf]
      %v188 = vld [vmem:[%s154 + $0x38] sm:$0xf]
      %v189 = vld [vmem:[%s154 + $0x3c] sm:$0xf]
      %v190 = vld [vmem:[%s154 + $0x40] sm:$0xf]
      %v191 = vld [vmem:[%s154 + $0x44] sm:$0xf]
      %v192 = vld [vmem:[%s154 + $0x48] sm:$0xf]
      %v193 = vld [vmem:[%s154 + $0x4c] sm:$0xf]
      %v194 = vld [vmem:[%s154 + $0x50] sm:$0xf]
      %v195 = vld [vmem:[%s154 + $0x54] sm:$0xf]
      %v196 = vld [vmem:[%s154 + $0x58] sm:$0xf]
      %v197 = vld [vmem:[%s154 + $0x5c] sm:$0xf]
      %v198 = vld [vmem:[%s154 + $0x60] sm:$0xf]
      %v199 = vld [vmem:[%s154 + $0x64] sm:$0xf]
      %v200 = vld [vmem:[%s154 + $0x68] sm:$0xf]
      %v201 = vld [vmem:[%s154 + $0x6c] sm:$0xf]
      %v202 = vld [vmem:[%s154 + $0x70] sm:$0xf]
      %v203 = vld [vmem:[%s154 + $0x74] sm:$0xf]
      %v204 = vld [vmem:[%s154 + $0x78] sm:$0xf]
      %v205 = vld [vmem:[%s154 + $0x7c] sm:$0xf]
      %v206 = vld [vmem:[%s154 + $0x80] sm:$0xf]
      %v207 = vld [vmem:[%s154 + $0x84] sm:$0xf]
      %v208 = vld [vmem:[%s154 + $0x88] sm:$0xf]
      %v209 = vld [vmem:[%s154 + $0x8c] sm:$0xf]
      %v210 = vld [vmem:[%s154 + $0x90] sm:$0xf]
      %v211 = vld [vmem:[%s154 + $0x94] sm:$0xf]
      %v212 = vld [vmem:[%s154 + $0x98] sm:$0xf]
      %v213 = vld [vmem:[%s154 + $0x9c] sm:$0xf]
      %v214 = vld [vmem:[%s154 + $0xa0] sm:$0xf]
      %v215 = vld [vmem:[%s154 + $0xa4] sm:$0xf]
      %v216 = vld [vmem:[%s154 + $0xa8] sm:$0xf]
      %v217 = vld [vmem:[%s154 + $0xac] sm:$0xf]
      %v218 = vld [vmem:[%s154 + $0xb0] sm:$0xf]
      %v219 = vld [vmem:[%s154 + $0xb4] sm:$0xf]
      %v220 = vld [vmem:[%s154 + $0xb8] sm:$0xf]
      %v221 = vld [vmem:[%s154 + $0xbc] sm:$0xf]
      %v222 = vld [vmem:[%s154 + $0xc0] sm:$0xf]
      %v223 = vld [vmem:[%s154 + $0xc4] sm:$0xf]
      %v224 = vld [vmem:[%s154 + $0xc8] sm:$0xf]
      %v225 = vld [vmem:[%s154 + $0xcc] sm:$0xf]
      %v226 = vld [vmem:[%s154 + $0xd0] sm:$0xf]
      %v227 = vld [vmem:[%s154 + $0xd4] sm:$0xf]
      %v228 = vld [vmem:[%s154 + $0xd8] sm:$0xf]
      %v229 = vld [vmem:[%s154 + $0xdc] sm:$0xf]
      %v230 = vld [vmem:[%s154 + $0xe0] sm:$0xf]
      %v231 = vld [vmem:[%s154 + $0xe4] sm:$0xf]
      %v232 = vld [vmem:[%s154 + $0xe8] sm:$0xf]
      %v233 = vld [vmem:[%s154 + $0xec] sm:$0xf]
      %v234 = vld [vmem:[%s154 + $0xf0] sm:$0xf]
      %v235 = vld [vmem:[%s154 + $0xf4] sm:$0xf]
      %v236 = vld [vmem:[%s154 + $0xf8] sm:$0xf]
      %v237 = vld [vmem:[%s154 + $0xfc] sm:$0xf]
      %v238 = vld [vmem:[%s1] sm:$0xf]
      %v239 = vld [vmem:[%s1 + $0x4] sm:$0xf]
      %v240 = vld [vmem:[%s1 + $0x8] sm:$0xf]
      %v241 = vld [vmem:[%s1 + $0xc] sm:$0x3]
      %v306 = vunpack.c.l.b16 %v174
      %v307 = vunpack.c.l.b16 %v175
      %v308 = vunpack.c.l.b16 %v176
      %v309 = vunpack.c.l.b16 %v177
      %v310 = vunpack.c.l.b16 %v178
      %v311 = vunpack.c.l.b16 %v179
      %v312 = vunpack.c.l.b16 %v180
      %v313 = vunpack.c.l.b16 %v181
      %v314 = vunpack.c.l.b16 %v182
      %v315 = vunpack.c.l.b16 %v183
      %v316 = vunpack.c.l.b16 %v184
      %v317 = vunpack.c.l.b16 %v185
      %v318 = vunpack.c.l.b16 %v186
      %v319 = vunpack.c.l.b16 %v187
      %v320 = vunpack.c.l.b16 %v188
      %v321 = vunpack.c.l.b16 %v189
      %v322 = vunpack.c.l.b16 %v190
      %v323 = vunpack.c.l.b16 %v191
      %v324 = vunpack.c.l.b16 %v192
      %v325 = vunpack.c.l.b16 %v193
      %v326 = vunpack.c.l.b16 %v194
      %v327 = vunpack.c.l.b16 %v195
      %v328 = vunpack.c.l.b16 %v196
      %v329 = vunpack.c.l.b16 %v197
      %v330 = vunpack.c.l.b16 %v198
      %v331 = vunpack.c.l.b16 %v199
      %v332 = vunpack.c.l.b16 %v200
      %v333 = vunpack.c.l.b16 %v201
      %v334 = vunpack.c.l.b16 %v202
      %v335 = vunpack.c.l.b16 %v203
      %v336 = vunpack.c.l.b16 %v204
      %v337 = vunpack.c.l.b16 %v205
      %v338 = vunpack.c.l.b16 %v206
      %v339 = vunpack.c.l.b16 %v207
      %v340 = vunpack.c.l.b16 %v208
      %v341 = vunpack.c.l.b16 %v209
      %v342 = vunpack.c.l.b16 %v210
      %v343 = vunpack.c.l.b16 %v211
      %v344 = vunpack.c.l.b16 %v212
      %v345 = vunpack.c.l.b16 %v213
      %v346 = vunpack.c.l.b16 %v214
      %v347 = vunpack.c.l.b16 %v215
      %v348 = vunpack.c.l.b16 %v216
      %v349 = vunpack.c.l.b16 %v217
      %v350 = vunpack.c.l.b16 %v218
      %v351 = vunpack.c.l.b16 %v219
      %v352 = vunpack.c.l.b16 %v220
      %v353 = vunpack.c.l.b16 %v221
      %v354 = vunpack.c.l.b16 %v222
      %v355 = vunpack.c.l.b16 %v223
      %v356 = vunpack.c.l.b16 %v224
      %v357 = vunpack.c.l.b16 %v225
      %v358 = vunpack.c.l.b16 %v226
      %v359 = vunpack.c.l.b16 %v227
      %v360 = vunpack.c.l.b16 %v228
      %v361 = vunpack.c.l.b16 %v229
      %v362 = vunpack.c.l.b16 %v230
      %v363 = vunpack.c.l.b16 %v231
      %v364 = vunpack.c.l.b16 %v232
      %v365 = vunpack.c.l.b16 %v233
      %v366 = vunpack.c.l.b16 %v234
      %v367 = vunpack.c.l.b16 %v235
      %v368 = vunpack.c.l.b16 %v236
      %v369 = vunpack.c.l.b16 %v237
      %v370 = vpack.c.b16 %v307, %v306
      %v371 = vpack.c.b16 %v309, %v308
      %v372 = vpack.c.b16 %v311, %v310
      %v373 = vpack.c.b16 %v313, %v312
      %v374 = vpack.c.b16 %v315, %v314
      %v375 = vpack.c.b16 %v317, %v316
      %v376 = vpack.c.b16 %v319, %v318
      %v377 = vpack.c.b16 %v321, %v320
      %v378 = vpack.c.b16 %v323, %v322
      %v379 = vpack.c.b16 %v325, %v324
      %v380 = vpack.c.b16 %v327, %v326
      %v381 = vpack.c.b16 %v329, %v328
      %v382 = vpack.c.b16 %v331, %v330
      %v383 = vpack.c.b16 %v333, %v332
      %v384 = vpack.c.b16 %v335, %v334
      %v385 = vpack.c.b16 %v337, %v336
      %v386 = vpack.c.b16 %v339, %v338
      %v387 = vpack.c.b16 %v341, %v340
      %v388 = vpack.c.b16 %v343, %v342
      %v389 = vpack.c.b16 %v345, %v344
      %v390 = vpack.c.b16 %v347, %v346
      %v391 = vpack.c.b16 %v349, %v348
      %v392 = vpack.c.b16 %v351, %v350
      %v393 = vpack.c.b16 %v353, %v352
      %v394 = vpack.c.b16 %v355, %v354
      %v395 = vpack.c.b16 %v357, %v356
      %v396 = vpack.c.b16 %v359, %v358
      %v397 = vpack.c.b16 %v361, %v360
      %v398 = vpack.c.b16 %v363, %v362
      %v399 = vpack.c.b16 %v365, %v364
      %v400 = vpack.c.b16 %v367, %v366
      %v401 = vpack.c.b16 %v369, %v368
      %v406 = vunpack.c.l.b16 %v238
      %v407 = vunpack.c.l.b16 %v239
      %v408 = vunpack.c.l.b16 %v240
      %v409 = vunpack.c.l.b16 %v241
      %v410 = vpack.c.b16 %v407, %v406
      %v411 = vpack.c.b16 %v409, %v408
      %vm413 = vcmask 220160
      %v415 = vsel %vm413, %v370, 0
      %v418 = vsel %vm413, %v371, 0
      %v421 = vsel %vm413, %v372, 0
      %v424 = vsel %vm413, %v373, 0
      %v427 = vsel %vm413, %v374, 0
      %v430 = vsel %vm413, %v375, 0
      %v433 = vsel %vm413, %v376, 0
      %v436 = vsel %vm413, %v377, 0
      %v439 = vsel %vm413, %v378, 0
      %v442 = vsel %vm413, %v379, 0
      %v445 = vsel %vm413, %v380, 0
      %v448 = vsel %vm413, %v381, 0
      %v451 = vsel %vm413, %v382, 0
      %v454 = vsel %vm413, %v383, 0
      %v457 = vsel %vm413, %v384, 0
      %v460 = vsel %vm413, %v385, 0
      %v463 = vsel %vm413, %v386, 0
      %v466 = vsel %vm413, %v387, 0
      %v469 = vsel %vm413, %v388, 0
      %v472 = vsel %vm413, %v389, 0
      %v475 = vsel %vm413, %v390, 0
      %v478 = vsel %vm413, %v391, 0
      %v481 = vsel %vm413, %v392, 0
      %v484 = vsel %vm413, %v393, 0
      %v487 = vsel %vm413, %v394, 0
      %v490 = vsel %vm413, %v395, 0
      %v493 = vsel %vm413, %v396, 0
      %v496 = vsel %vm413, %v397, 0
      %v499 = vsel %vm413, %v398, 0
      %v502 = vsel %vm413, %v399, 0
      %v505 = vsel %vm413, %v400, 0
      %v508 = vsel %vm413, %v401, 0
      %vm510 = vcmask 1044480
      %vm511 = vcmask 1045504
      %v512 = vsel %vm510, 4294967295, 65535
      %v513 = vsel %vm511, %v512, 0
      %v515 = vand.u32 %v411, %v513
      %517 = vmatpush.bf16.msra.mxu0 0
      %518 = vmatpush.bf16.msra.mxu0 0
      %519 = vmatpush.bf16.msra.mxu0 0
      %520 = vmatpush.bf16.msra.mxu0 0
      %521 = vmatpush.bf16.msra.mxu0 0
      %522 = vmatpush.bf16.msra.mxu0 0
      %523 = vmatpush.bf16.msra.mxu0 %v515
      %524 = vmatpush.bf16.msra.mxu0 %v410
      %525 = vmatmul.bf16.gmra.mxu0 %v415
      %v526 = vpop.f32.mrf.mxu0
      %v527 = vadd.f32 0.0, %v526
      %v528 = vpop.f32.mrf.mxu0
      %v529 = vadd.f32 0.0, %v528
      %530 = vmatmul.bf16.gmra.mxu0 %v418
      %v531 = vpop.f32.mrf.mxu0
      %v532 = vadd.f32 0.0, %v531
      %v533 = vpop.f32.mrf.mxu0
      %v534 = vadd.f32 0.0, %v533
      %535 = vmatmul.bf16.gmra.mxu0 %v421
      %v536 = vpop.f32.mrf.mxu0
      %v537 = vadd.f32 0.0, %v536
      %v538 = vpop.f32.mrf.mxu0
      %v539 = vadd.f32 0.0, %v538
      %540 = vmatmul.bf16.gmra.mxu0 %v424
      %v541 = vpop.f32.mrf.mxu0
      %v542 = vadd.f32 0.0, %v541
      %v543 = vpop.f32.mrf.mxu0
      %v544 = vadd.f32 0.0, %v543
      %545 = vmatmul.bf16.gmra.mxu0 %v427
      %v546 = vpop.f32.mrf.mxu0
      %v547 = vadd.f32 0.0, %v546
      %v548 = vpop.f32.mrf.mxu0
      %v549 = vadd.f32 0.0, %v548
      %550 = vmatmul.bf16.gmra.mxu0 %v430
      %v551 = vpop.f32.mrf.mxu0
      %v552 = vadd.f32 0.0, %v551
      %v553 = vpop.f32.mrf.mxu0
      %v554 = vadd.f32 0.0, %v553
      %555 = vmatmul.bf16.gmra.mxu0 %v433
      %v556 = vpop.f32.mrf.mxu0
      %v557 = vadd.f32 0.0, %v556
      %v558 = vpop.f32.mrf.mxu0
      %v559 = vadd.f32 0.0, %v558
      %560 = vmatmul.bf16.gmra.mxu0 %v436
      %v561 = vpop.f32.mrf.mxu0
      %v562 = vadd.f32 0.0, %v561
      %v563 = vpop.f32.mrf.mxu0
      %v564 = vadd.f32 0.0, %v563
      %565 = vmatmul.bf16.gmra.mxu0 %v439
      %v566 = vpop.f32.mrf.mxu0
      %v567 = vadd.f32 0.0, %v566
      %v568 = vpop.f32.mrf.mxu0
      %v569 = vadd.f32 0.0, %v568
      %570 = vmatmul.bf16.gmra.mxu0 %v442
      %v571 = vpop.f32.mrf.mxu0
      %v572 = vadd.f32 0.0, %v571
      %v573 = vpop.f32.mrf.mxu0
      %v574 = vadd.f32 0.0, %v573
      %575 = vmatmul.bf16.gmra.mxu0 %v445
      %v576 = vpop.f32.mrf.mxu0
      %v577 = vadd.f32 0.0, %v576
      %v578 = vpop.f32.mrf.mxu0
      %v579 = vadd.f32 0.0, %v578
      %580 = vmatmul.bf16.gmra.mxu0 %v448
      %v581 = vpop.f32.mrf.mxu0
      %v582 = vadd.f32 0.0, %v581
      %v583 = vpop.f32.mrf.mxu0
      %v584 = vadd.f32 0.0, %v583
      %585 = vmatmul.bf16.gmra.mxu0 %v451
      %v586 = vpop.f32.mrf.mxu0
      %v587 = vadd.f32 0.0, %v586
      %v588 = vpop.f32.mrf.mxu0
      %v589 = vadd.f32 0.0, %v588
      %590 = vmatmul.bf16.gmra.mxu0 %v454
      %v591 = vpop.f32.mrf.mxu0
      %v592 = vadd.f32 0.0, %v591
      %v593 = vpop.f32.mrf.mxu0
      %v594 = vadd.f32 0.0, %v593
      %595 = vmatmul.bf16.gmra.mxu0 %v457
      %v596 = vpop.f32.mrf.mxu0
      %v597 = vadd.f32 0.0, %v596
      %v598 = vpop.f32.mrf.mxu0
      %v599 = vadd.f32 0.0, %v598
      %600 = vmatmul.bf16.gmra.mxu0 %v460
      %v601 = vpop.f32.mrf.mxu0
      %v602 = vadd.f32 0.0, %v601
      %v603 = vpop.f32.mrf.mxu0
      %v604 = vadd.f32 0.0, %v603
      %605 = vmatmul.bf16.gmra.mxu0 %v463
      %v606 = vpop.f32.mrf.mxu0
      %v607 = vadd.f32 0.0, %v606
      %v608 = vpop.f32.mrf.mxu0
      %v609 = vadd.f32 0.0, %v608
      %610 = vmatmul.bf16.gmra.mxu0 %v466
      %v611 = vpop.f32.mrf.mxu0
      %v612 = vadd.f32 0.0, %v611
      %v613 = vpop.f32.mrf.mxu0
      %v614 = vadd.f32 0.0, %v613
      %615 = vmatmul.bf16.gmra.mxu0 %v469
      %v616 = vpop.f32.mrf.mxu0
      %v617 = vadd.f32 0.0, %v616
      %v618 = vpop.f32.mrf.mxu0
      %v619 = vadd.f32 0.0, %v618
      %620 = vmatmul.bf16.gmra.mxu0 %v472
      %v621 = vpop.f32.mrf.mxu0
      %v622 = vadd.f32 0.0, %v621
      %v623 = vpop.f32.mrf.mxu0
      %v624 = vadd.f32 0.0, %v623
      %625 = vmatmul.bf16.gmra.mxu0 %v475
      %v626 = vpop.f32.mrf.mxu0
      %v627 = vadd.f32 0.0, %v626
      %v628 = vpop.f32.mrf.mxu0
      %v629 = vadd.f32 0.0, %v628
      %630 = vmatmul.bf16.gmra.mxu0 %v478
      %v631 = vpop.f32.mrf.mxu0
      %v632 = vadd.f32 0.0, %v631
      %v633 = vpop.f32.mrf.mxu0
      %v634 = vadd.f32 0.0, %v633
      %635 = vmatmul.bf16.gmra.mxu0 %v481
      %v636 = vpop.f32.mrf.mxu0
      %v637 = vadd.f32 0.0, %v636
      %v638 = vpop.f32.mrf.mxu0
      %v639 = vadd.f32 0.0, %v638
      %640 = vmatmul.bf16.gmra.mxu0 %v484
      %v641 = vpop.f32.mrf.mxu0
      %v642 = vadd.f32 0.0, %v641
      %v643 = vpop.f32.mrf.mxu0
      %v644 = vadd.f32 0.0, %v643
      %645 = vmatmul.bf16.gmra.mxu0 %v487
      %v646 = vpop.f32.mrf.mxu0
      %v647 = vadd.f32 0.0, %v646
      %v648 = vpop.f32.mrf.mxu0
      %v649 = vadd.f32 0.0, %v648
      %650 = vmatmul.bf16.gmra.mxu0 %v490
      %v651 = vpop.f32.mrf.mxu0
      %v652 = vadd.f32 0.0, %v651
      %v653 = vpop.f32.mrf.mxu0
      %v654 = vadd.f32 0.0, %v653
      %655 = vmatmul.bf16.gmra.mxu0 %v493
      %v656 = vpop.f32.mrf.mxu0
      %v657 = vadd.f32 0.0, %v656
      %v658 = vpop.f32.mrf.mxu0
      %v659 = vadd.f32 0.0, %v658
      %660 = vmatmul.bf16.gmra.mxu0 %v496
      %v661 = vpop.f32.mrf.mxu0
      %v662 = vadd.f32 0.0, %v661
      %v663 = vpop.f32.mrf.mxu0
      %v664 = vadd.f32 0.0, %v663
      %665 = vmatmul.bf16.gmra.mxu0 %v499
      %v666 = vpop.f32.mrf.mxu0
      %v667 = vadd.f32 0.0, %v666
      %v668 = vpop.f32.mrf.mxu0
      %v669 = vadd.f32 0.0, %v668
      %670 = vmatmul.bf16.gmra.mxu0 %v502
      %v671 = vpop.f32.mrf.mxu0
      %v672 = vadd.f32 0.0, %v671
      %v673 = vpop.f32.mrf.mxu0
      %v674 = vadd.f32 0.0, %v673
      %675 = vmatmul.bf16.gmra.mxu0 %v505
      %v676 = vpop.f32.mrf.mxu0
      %v677 = vadd.f32 0.0, %v676
      %v678 = vpop.f32.mrf.mxu0
      %v679 = vadd.f32 0.0, %v678
      %680 = vmatmul.bf16.gmra.mxu0 %v508
      %v681 = vpop.f32.mrf.mxu0
      %v682 = vadd.f32 0.0, %v681
      %v683 = vpop.f32.mrf.mxu0
      %v684 = vadd.f32 0.0, %v683
      %685 = vdwg.mxu0
      // Predicated region
      $region33: #{mm_bn_p.1} parent=27 // pred_check
        %p686 = pneg %p165
      $region34: #{mm_bn_p.1} parent=27 // pred_check_branch
        %688 = sbr.rel (%p686) target = $region36
      $region35: #{mm_bn_p.1} parent=27 // pred_region
        %v689 = vld [vmem:[#allocation2] sm:$0x1]
        %vm690 = vcmask 97280
        %v691 = vsel %vm690, %v527, 0.0
        %v692 = vsel %vm690, %v529, 0.0
        %v693 = vadd.f32 %v691, %v692
        %v694 = vsel %vm690, %v532, 0.0
        %v695 = vadd.f32 %v693, %v694
        %v696 = vsel %vm690, %v534, 0.0
        %v697 = vadd.f32 %v695, %v696
        %v698 = vsel %vm690, %v537, 0.0
        %v699 = vadd.f32 %v697, %v698
        %v700 = vsel %vm690, %v539, 0.0
        %v701 = vadd.f32 %v699, %v700
        %v702 = vsel %vm690, %v542, 0.0
        %v703 = vadd.f32 %v701, %v702
        %v704 = vsel %vm690, %v544, 0.0
        %v705 = vadd.f32 %v703, %v704
        %v706 = vsel %vm690, %v547, 0.0
        %v707 = vadd.f32 %v705, %v706
        %v708 = vsel %vm690, %v549, 0.0
        %v709 = vadd.f32 %v707, %v708
        %v710 = vsel %vm690, %v552, 0.0
        %v711 = vadd.f32 %v709, %v710
        %v712 = vsel %vm690, %v554, 0.0
        %v713 = vadd.f32 %v711, %v712
        %v714 = vsel %vm690, %v557, 0.0
        %v715 = vadd.f32 %v713, %v714
        %v716 = vsel %vm690, %v559, 0.0
        %v717 = vadd.f32 %v715, %v716
        %v718 = vsel %vm690, %v562, 0.0
        %v719 = vadd.f32 %v717, %v718
        %v720 = vsel %vm690, %v564, 0.0
        %v721 = vadd.f32 %v719, %v720
        %v722 = vsel %vm690, %v567, 0.0
        %v723 = vadd.f32 %v721, %v722
        %v724 = vsel %vm690, %v569, 0.0
        %v725 = vadd.f32 %v723, %v724
        %v726 = vsel %vm690, %v572, 0.0
        %v727 = vadd.f32 %v725, %v726
        %v728 = vsel %vm690, %v574, 0.0
        %v729 = vadd.f32 %v727, %v728
        %v730 = vsel %vm690, %v577, 0.0
        %v731 = vadd.f32 %v729, %v730
        %v732 = vsel %vm690, %v579, 0.0
        %v733 = vadd.f32 %v731, %v732
        %v734 = vsel %vm690, %v582, 0.0
        %v735 = vadd.f32 %v733, %v734
        %v736 = vsel %vm690, %v584, 0.0
        %v737 = vadd.f32 %v735, %v736
        %v738 = vsel %vm690, %v587, 0.0
        %v739 = vadd.f32 %v737, %v738
        %v740 = vsel %vm690, %v589, 0.0
        %v741 = vadd.f32 %v739, %v740
        %v742 = vsel %vm690, %v592, 0.0
        %v743 = vadd.f32 %v741, %v742
        %v744 = vsel %vm690, %v594, 0.0
        %v745 = vadd.f32 %v743, %v744
        %v746 = vsel %vm690, %v597, 0.0
        %v747 = vadd.f32 %v745, %v746
        %v748 = vsel %vm690, %v599, 0.0
        %v749 = vadd.f32 %v747, %v748
        %v750 = vsel %vm690, %v602, 0.0
        %v751 = vadd.f32 %v749, %v750
        %v752 = vsel %vm690, %v604, 0.0
        %v753 = vadd.f32 %v751, %v752
        %v754 = vsel %vm690, %v607, 0.0
        %v755 = vadd.f32 %v753, %v754
        %v756 = vsel %vm690, %v609, 0.0
        %v757 = vadd.f32 %v755, %v756
        %v758 = vsel %vm690, %v612, 0.0
        %v759 = vadd.f32 %v757, %v758
        %v760 = vsel %vm690, %v614, 0.0
        %v761 = vadd.f32 %v759, %v760
        %v762 = vsel %vm690, %v617, 0.0
        %v763 = vadd.f32 %v761, %v762
        %v764 = vsel %vm690, %v619, 0.0
        %v765 = vadd.f32 %v763, %v764
        %v766 = vsel %vm690, %v622, 0.0
        %v767 = vadd.f32 %v765, %v766
        %v768 = vsel %vm690, %v624, 0.0
        %v769 = vadd.f32 %v767, %v768
        %v770 = vsel %vm690, %v627, 0.0
        %v771 = vadd.f32 %v769, %v770
        %v772 = vsel %vm690, %v629, 0.0
        %v773 = vadd.f32 %v771, %v772
        %v774 = vsel %vm690, %v632, 0.0
        %v775 = vadd.f32 %v773, %v774
        %v776 = vsel %vm690, %v634, 0.0
        %v777 = vadd.f32 %v775, %v776
        %v778 = vsel %vm690, %v637, 0.0
        %v779 = vadd.f32 %v777, %v778
        %v780 = vsel %vm690, %v639, 0.0
        %v781 = vadd.f32 %v779, %v780
        %v782 = vsel %vm690, %v642, 0.0
        %v783 = vadd.f32 %v781, %v782
        %v784 = vsel %vm690, %v644, 0.0
        %v785 = vadd.f32 %v783, %v784
        %v786 = vsel %vm690, %v647, 0.0
        %v787 = vadd.f32 %v785, %v786
        %v788 = vsel %vm690, %v649, 0.0
        %v789 = vadd.f32 %v787, %v788
        %v790 = vsel %vm690, %v652, 0.0
        %v791 = vadd.f32 %v789, %v790
        %v792 = vsel %vm690, %v654, 0.0
        %v793 = vadd.f32 %v791, %v792
        %v794 = vsel %vm690, %v657, 0.0
        %v795 = vadd.f32 %v793, %v794
        %v796 = vsel %vm690, %v659, 0.0
        %v797 = vadd.f32 %v795, %v796
        %v798 = vsel %vm690, %v662, 0.0
        %v799 = vadd.f32 %v797, %v798
        %v800 = vsel %vm690, %v664, 0.0
        %v801 = vadd.f32 %v799, %v800
        %v802 = vsel %vm690, %v667, 0.0
        %v803 = vadd.f32 %v801, %v802
        %v804 = vsel %vm690, %v669, 0.0
        %v805 = vadd.f32 %v803, %v804
        %v806 = vsel %vm690, %v672, 0.0
        %v807 = vadd.f32 %v805, %v806
        %v808 = vsel %vm690, %v674, 0.0
        %v809 = vadd.f32 %v807, %v808
        %v810 = vsel %vm690, %v677, 0.0
        %v811 = vadd.f32 %v809, %v810
        %v812 = vsel %vm690, %v679, 0.0
        %v813 = vadd.f32 %v811, %v812
        %v814 = vsel %vm690, %v682, 0.0
        %v815 = vadd.f32 %v813, %v814
        %v816 = vsel %vm690, %v684, 0.0
        %v817 = vadd.f32 %v815, %v816
        %v818 = vrot.slane %v817, 4
        %v819 = vadd.f32 %v817, %v818
        %v820 = vrot.slane %v819, 2
        %v821 = vadd.f32 %v819, %v820
        %v822 = vrot.slane %v821, 1
        %v823 = vadd.f32 %v821, %v822
        %v824 = vadd.f32 %v689, %v823
        %vm825 = vcmask 90112
        %826 = vst.msk [vmem:[#allocation2] sm:$0x1] %vm825, %v824
        %v827 = vld [vmem:[#allocation3] sm:$0x1]
        %v828 = vmul.f32 %v527, %v527
        %v829 = vmul.f32 %v529, %v529
        %v830 = vmul.f32 %v532, %v532
        %v831 = vmul.f32 %v534, %v534
        %v832 = vmul.f32 %v537, %v537
        %v833 = vmul.f32 %v539, %v539
        %v834 = vmul.f32 %v542, %v542
        %v835 = vmul.f32 %v544, %v544
        %v836 = vmul.f32 %v547, %v547
        %v837 = vmul.f32 %v549, %v549
        %v838 = vmul.f32 %v552, %v552
        %v839 = vmul.f32 %v554, %v554
        %v840 = vmul.f32 %v557, %v557
        %v841 = vmul.f32 %v559, %v559
        %v842 = vmul.f32 %v562, %v562
        %v843 = vmul.f32 %v564, %v564
        %v844 = vmul.f32 %v567, %v567
        %v845 = vmul.f32 %v569, %v569
        %v846 = vmul.f32 %v572, %v572
        %v847 = vmul.f32 %v574, %v574
        %v848 = vmul.f32 %v577, %v577
        %v849 = vmul.f32 %v579, %v579
        %v850 = vmul.f32 %v582, %v582
        %v851 = vmul.f32 %v584, %v584
        %v852 = vmul.f32 %v587, %v587
        %v853 = vmul.f32 %v589, %v589
        %v854 = vmul.f32 %v592, %v592
        %v855 = vmul.f32 %v594, %v594
        %v856 = vmul.f32 %v597, %v597
        %v857 = vmul.f32 %v599, %v599
        %v858 = vmul.f32 %v602, %v602
        %v859 = vmul.f32 %v604, %v604
        %v860 = vmul.f32 %v607, %v607
        %v861 = vmul.f32 %v609, %v609
        %v862 = vmul.f32 %v612, %v612
        %v863 = vmul.f32 %v614, %v614
        %v864 = vmul.f32 %v617, %v617
        %v865 = vmul.f32 %v619, %v619
        %v866 = vmul.f32 %v622, %v622
        %v867 = vmul.f32 %v624, %v624
        %v868 = vmul.f32 %v627, %v627
        %v869 = vmul.f32 %v629, %v629
        %v870 = vmul.f32 %v632, %v632
        %v871 = vmul.f32 %v634, %v634
        %v872 = vmul.f32 %v637, %v637
        %v873 = vmul.f32 %v639, %v639
        %v874 = vmul.f32 %v642, %v642
        %v875 = vmul.f32 %v644, %v644
        %v876 = vmul.f32 %v647, %v647
        %v877 = vmul.f32 %v649, %v649
        %v878 = vmul.f32 %v652, %v652
        %v879 = vmul.f32 %v654, %v654
        %v880 = vmul.f32 %v657, %v657
        %v881 = vmul.f32 %v659, %v659
        %v882 = vmul.f32 %v662, %v662
        %v883 = vmul.f32 %v664, %v664
        %v884 = vmul.f32 %v667, %v667
        %v885 = vmul.f32 %v669, %v669
        %v886 = vmul.f32 %v672, %v672
        %v887 = vmul.f32 %v674, %v674
        %v888 = vmul.f32 %v677, %v677
        %v889 = vmul.f32 %v679, %v679
        %v890 = vmul.f32 %v682, %v682
        %v891 = vmul.f32 %v684, %v684
        %v892 = vsel %vm690, %v828, 0.0
        %v893 = vsel %vm690, %v829, 0.0
        %v894 = vadd.f32 %v892, %v893
        %v895 = vsel %vm690, %v830, 0.0
        %v896 = vadd.f32 %v894, %v895
        %v897 = vsel %vm690, %v831, 0.0
        %v898 = vadd.f32 %v896, %v897
        %v899 = vsel %vm690, %v832, 0.0
        %v900 = vadd.f32 %v898, %v899
        %v901 = vsel %vm690, %v833, 0.0
        %v902 = vadd.f32 %v900, %v901
        %v903 = vsel %vm690, %v834, 0.0
        %v904 = vadd.f32 %v902, %v903
        %v905 = vsel %vm690, %v835, 0.0
        %v906 = vadd.f32 %v904, %v905
        %v907 = vsel %vm690, %v836, 0.0
        %v908 = vadd.f32 %v906, %v907
        %v909 = vsel %vm690, %v837, 0.0
        %v910 = vadd.f32 %v908, %v909
        %v911 = vsel %vm690, %v838, 0.0
        %v912 = vadd.f32 %v910, %v911
        %v913 = vsel %vm690, %v839, 0.0
        %v914 = vadd.f32 %v912, %v913
        %v915 = vsel %vm690, %v840, 0.0
        %v916 = vadd.f32 %v914, %v915
        %v917 = vsel %vm690, %v841, 0.0
        %v918 = vadd.f32 %v916, %v917
        %v919 = vsel %vm690, %v842, 0.0
        %v920 = vadd.f32 %v918, %v919
        %v921 = vsel %vm690, %v843, 0.0
        %v922 = vadd.f32 %v920, %v921
        %v923 = vsel %vm690, %v844, 0.0
        %v924 = vadd.f32 %v922, %v923
        %v925 = vsel %vm690, %v845, 0.0
        %v926 = vadd.f32 %v924, %v925
        %v927 = vsel %vm690, %v846, 0.0
        %v928 = vadd.f32 %v926, %v927
        %v929 = vsel %vm690, %v847, 0.0
        %v930 = vadd.f32 %v928, %v929
        %v931 = vsel %vm690, %v848, 0.0
        %v932 = vadd.f32 %v930, %v931
        %v933 = vsel %vm690, %v849, 0.0
        %v934 = vadd.f32 %v932, %v933
        %v935 = vsel %vm690, %v850, 0.0
        %v936 = vadd.f32 %v934, %v935
        %v937 = vsel %vm690, %v851, 0.0
        %v938 = vadd.f32 %v936, %v937
        %v939 = vsel %vm690, %v852, 0.0
        %v940 = vadd.f32 %v938, %v939
        %v941 = vsel %vm690, %v853, 0.0
        %v942 = vadd.f32 %v940, %v941
        %v943 = vsel %vm690, %v854, 0.0
        %v944 = vadd.f32 %v942, %v943
        %v945 = vsel %vm690, %v855, 0.0
        %v946 = vadd.f32 %v944, %v945
        %v947 = vsel %vm690, %v856, 0.0
        %v948 = vadd.f32 %v946, %v947
        %v949 = vsel %vm690, %v857, 0.0
        %v950 = vadd.f32 %v948, %v949
        %v951 = vsel %vm690, %v858, 0.0
        %v952 = vadd.f32 %v950, %v951
        %v953 = vsel %vm690, %v859, 0.0
        %v954 = vadd.f32 %v952, %v953
        %v955 = vsel %vm690, %v860, 0.0
        %v956 = vadd.f32 %v954, %v955
        %v957 = vsel %vm690, %v861, 0.0
        %v958 = vadd.f32 %v956, %v957
        %v959 = vsel %vm690, %v862, 0.0
        %v960 = vadd.f32 %v958, %v959
        %v961 = vsel %vm690, %v863, 0.0
        %v962 = vadd.f32 %v960, %v961
        %v963 = vsel %vm690, %v864, 0.0
        %v964 = vadd.f32 %v962, %v963
        %v965 = vsel %vm690, %v865, 0.0
        %v966 = vadd.f32 %v964, %v965
        %v967 = vsel %vm690, %v866, 0.0
        %v968 = vadd.f32 %v966, %v967
        %v969 = vsel %vm690, %v867, 0.0
        %v970 = vadd.f32 %v968, %v969
        %v971 = vsel %vm690, %v868, 0.0
        %v972 = vadd.f32 %v970, %v971
        %v973 = vsel %vm690, %v869, 0.0
        %v974 = vadd.f32 %v972, %v973
        %v975 = vsel %vm690, %v870, 0.0
        %v976 = vadd.f32 %v974, %v975
        %v977 = vsel %vm690, %v871, 0.0
        %v978 = vadd.f32 %v976, %v977
        %v979 = vsel %vm690, %v872, 0.0
        %v980 = vadd.f32 %v978, %v979
        %v981 = vsel %vm690, %v873, 0.0
        %v982 = vadd.f32 %v980, %v981
        %v983 = vsel %vm690, %v874, 0.0
        %v984 = vadd.f32 %v982, %v983
        %v985 = vsel %vm690, %v875, 0.0
        %v986 = vadd.f32 %v984, %v985
        %v987 = vsel %vm690, %v876, 0.0
        %v988 = vadd.f32 %v986, %v987
        %v989 = vsel %vm690, %v877, 0.0
        %v990 = vadd.f32 %v988, %v989
        %v991 = vsel %vm690, %v878, 0.0
        %v992 = vadd.f32 %v990, %v991
        %v993 = vsel %vm690, %v879, 0.0
        %v994 = vadd.f32 %v992, %v993
        %v995 = vsel %vm690, %v880, 0.0
        %v996 = vadd.f32 %v994, %v995
        %v997 = vsel %vm690, %v881, 0.0
        %v998 = vadd.f32 %v996, %v997
        %v999 = vsel %vm690, %v882, 0.0
        %v1000 = vadd.f32 %v998, %v999
        %v1001 = vsel %vm690, %v883, 0.0
        %v1002 = vadd.f32 %v1000, %v1001
        %v1003 = vsel %vm690, %v884, 0.0
        %v1004 = vadd.f32 %v1002, %v1003
        %v1005 = vsel %vm690, %v885, 0.0
        %v1006 = vadd.f32 %v1004, %v1005
        %v1007 = vsel %vm690, %v886, 0.0
        %v1008 = vadd.f32 %v1006, %v1007
        %v1009 = vsel %vm690, %v887, 0.0
        %v1010 = vadd.f32 %v1008, %v1009
        %v1011 = vsel %vm690, %v888, 0.0
        %v1012 = vadd.f32 %v1010, %v1011
        %v1013 = vsel %vm690, %v889, 0.0
        %v1014 = vadd.f32 %v1012, %v1013
        %v1015 = vsel %vm690, %v890, 0.0
        %v1016 = vadd.f32 %v1014, %v1015
        %v1017 = vsel %vm690, %v891, 0.0
        %v1018 = vadd.f32 %v1016, %v1017
        %v1019 = vrot.slane %v1018, 4
        %v1020 = vadd.f32 %v1018, %v1019
        %v1021 = vrot.slane %v1020, 2
        %v1022 = vadd.f32 %v1020, %v1021
        %v1023 = vrot.slane %v1022, 1
        %v1024 = vadd.f32 %v1022, %v1023
        %v1025 = vadd.f32 %v827, %v1024
        %1026 = vst.msk [vmem:[#allocation3] sm:$0x1] %vm825, %v1025
      $region36: #{mm_bn_p.1} parent=27 // pred_fallthru
        _
      %p1027 = scmp.eq.s32.totalorder %s17, 1
      // Predicated region
      $region37: #{mm_bn_p.1} parent=27 // pred_check
        %p1028 = pneg %p1027
      $region38: #{mm_bn_p.1} parent=27 // pred_check_branch
        %1030 = sbr.rel (%p1028) target = $region40
      $region39: #{mm_bn_p.1} parent=27 // pred_region
        %v1031 = vld [vmem:[#allocation2] sm:$0x1]
        %v1032 = vmul.f32 %v1031, 0.001953125
        %v1033 = vld [vmem:[#allocation3] sm:$0x1]
        %v1034 = vmul.f32 %v1033, 0.001953125
        %v1035 = vmul.f32 %v1032, %v1032
        %v1036 = vsub.f32 %v1034, %v1035
        %v1037 = vmax.f32 %v1036, 0.0
        %v1039 = vperm.slane %v1032, 0
        %v1041 = vsub.f32 %v527, %v1039
        %v1042 = vsub.f32 %v529, %v1039
        %v1043 = vsub.f32 %v532, %v1039
        %v1044 = vsub.f32 %v534, %v1039
        %v1045 = vsub.f32 %v537, %v1039
        %v1046 = vsub.f32 %v539, %v1039
        %v1047 = vsub.f32 %v542, %v1039
        %v1048 = vsub.f32 %v544, %v1039
        %v1049 = vsub.f32 %v547, %v1039
        %v1050 = vsub.f32 %v549, %v1039
        %v1051 = vsub.f32 %v552, %v1039
        %v1052 = vsub.f32 %v554, %v1039
        %v1053 = vsub.f32 %v557, %v1039
        %v1054 = vsub.f32 %v559, %v1039
        %v1055 = vsub.f32 %v562, %v1039
        %v1056 = vsub.f32 %v564, %v1039
        %v1057 = vsub.f32 %v567, %v1039
        %v1058 = vsub.f32 %v569, %v1039
        %v1059 = vsub.f32 %v572, %v1039
        %v1060 = vsub.f32 %v574, %v1039
        %v1061 = vsub.f32 %v577, %v1039
        %v1062 = vsub.f32 %v579, %v1039
        %v1063 = vsub.f32 %v582, %v1039
        %v1064 = vsub.f32 %v584, %v1039
        %v1065 = vsub.f32 %v587, %v1039
        %v1066 = vsub.f32 %v589, %v1039
        %v1067 = vsub.f32 %v592, %v1039
        %v1068 = vsub.f32 %v594, %v1039
        %v1069 = vsub.f32 %v597, %v1039
        %v1070 = vsub.f32 %v599, %v1039
        %v1071 = vsub.f32 %v602, %v1039
        %v1072 = vsub.f32 %v604, %v1039
        %v1073 = vsub.f32 %v607, %v1039
        %v1074 = vsub.f32 %v609, %v1039
        %v1075 = vsub.f32 %v612, %v1039
        %v1076 = vsub.f32 %v614, %v1039
        %v1077 = vsub.f32 %v617, %v1039
        %v1078 = vsub.f32 %v619, %v1039
        %v1079 = vsub.f32 %v622, %v1039
        %v1080 = vsub.f32 %v624, %v1039
        %v1081 = vsub.f32 %v627, %v1039
        %v1082 = vsub.f32 %v629, %v1039
        %v1083 = vsub.f32 %v632, %v1039
        %v1084 = vsub.f32 %v634, %v1039
        %v1085 = vsub.f32 %v637, %v1039
        %v1086 = vsub.f32 %v639, %v1039
        %v1087 = vsub.f32 %v642, %v1039
        %v1088 = vsub.f32 %v644, %v1039
        %v1089 = vsub.f32 %v647, %v1039
        %v1090 = vsub.f32 %v649, %v1039
        %v1091 = vsub.f32 %v652, %v1039
        %v1092 = vsub.f32 %v654, %v1039
        %v1093 = vsub.f32 %v657, %v1039
        %v1094 = vsub.f32 %v659, %v1039
        %v1095 = vsub.f32 %v662, %v1039
        %v1096 = vsub.f32 %v664, %v1039
        %v1097 = vsub.f32 %v667, %v1039
        %v1098 = vsub.f32 %v669, %v1039
        %v1099 = vsub.f32 %v672, %v1039
        %v1100 = vsub.f32 %v674, %v1039
        %v1101 = vsub.f32 %v677, %v1039
        %v1102 = vsub.f32 %v679, %v1039
        %v1103 = vsub.f32 %v682, %v1039
        %v1104 = vsub.f32 %v684, %v1039
        %v1105 = vadd.f32 %v1037, 1e-05
        %v1106 = vrsqrt.pop %v1105
        %v1107 = vmul.f32 %v1106, %v1105
        %v1108 = vmul.f32 %v1107, %v1106
        %v1109 = vmul.f32 0.5, %v1108
        %v1110 = vsub.f32 1.5, %v1109
        %v1111 = vmul.f32 %v1106, %v1110
        %vm1112 = vweird.f32 %v1105
        %vm1113 = vweird.f32 %v1106
        %vm1114 = vmor %vm1112, %vm1113
        %v1115 = vsel %vm1114, %v1106, %v1111
        %v1117 = vperm.slane %v1115, 0
        %v1119 = vmul.f32 %v1041, %v1117
        %v1120 = vmul.f32 %v1042, %v1117
        %v1121 = vmul.f32 %v1043, %v1117
        %v1122 = vmul.f32 %v1044, %v1117
        %v1123 = vmul.f32 %v1045, %v1117
        %v1124 = vmul.f32 %v1046, %v1117
        %v1125 = vmul.f32 %v1047, %v1117
        %v1126 = vmul.f32 %v1048, %v1117
        %v1127 = vmul.f32 %v1049, %v1117
        %v1128 = vmul.f32 %v1050, %v1117
        %v1129 = vmul.f32 %v1051, %v1117
        %v1130 = vmul.f32 %v1052, %v1117
        %v1131 = vmul.f32 %v1053, %v1117
        %v1132 = vmul.f32 %v1054, %v1117
        %v1133 = vmul.f32 %v1055, %v1117
        %v1134 = vmul.f32 %v1056, %v1117
        %v1135 = vmul.f32 %v1057, %v1117
        %v1136 = vmul.f32 %v1058, %v1117
        %v1137 = vmul.f32 %v1059, %v1117
        %v1138 = vmul.f32 %v1060, %v1117
        %v1139 = vmul.f32 %v1061, %v1117
        %v1140 = vmul.f32 %v1062, %v1117
        %v1141 = vmul.f32 %v1063, %v1117
        %v1142 = vmul.f32 %v1064, %v1117
        %v1143 = vmul.f32 %v1065, %v1117
        %v1144 = vmul.f32 %v1066, %v1117
        %v1145 = vmul.f32 %v1067, %v1117
        %v1146 = vmul.f32 %v1068, %v1117
        %v1147 = vmul.f32 %v1069, %v1117
        %v1148 = vmul.f32 %v1070, %v1117
        %v1149 = vmul.f32 %v1071, %v1117
        %v1150 = vmul.f32 %v1072, %v1117
        %v1151 = vmul.f32 %v1073, %v1117
        %v1152 = vmul.f32 %v1074, %v1117
        %v1153 = vmul.f32 %v1075, %v1117
        %v1154 = vmul.f32 %v1076, %v1117
        %v1155 = vmul.f32 %v1077, %v1117
        %v1156 = vmul.f32 %v1078, %v1117
        %v1157 = vmul.f32 %v1079, %v1117
        %v1158 = vmul.f32 %v1080, %v1117
        %v1159 = vmul.f32 %v1081, %v1117
        %v1160 = vmul.f32 %v1082, %v1117
        %v1161 = vmul.f32 %v1083, %v1117
        %v1162 = vmul.f32 %v1084, %v1117
        %v1163 = vmul.f32 %v1085, %v1117
        %v1164 = vmul.f32 %v1086, %v1117
        %v1165 = vmul.f32 %v1087, %v1117
        %v1166 = vmul.f32 %v1088, %v1117
        %v1167 = vmul.f32 %v1089, %v1117
        %v1168 = vmul.f32 %v1090, %v1117
        %v1169 = vmul.f32 %v1091, %v1117
        %v1170 = vmul.f32 %v1092, %v1117
        %v1171 = vmul.f32 %v1093, %v1117
        %v1172 = vmul.f32 %v1094, %v1117
        %v1173 = vmul.f32 %v1095, %v1117
        %v1174 = vmul.f32 %v1096, %v1117
        %v1175 = vmul.f32 %v1097, %v1117
        %v1176 = vmul.f32 %v1098, %v1117
        %v1177 = vmul.f32 %v1099, %v1117
        %v1178 = vmul.f32 %v1100, %v1117
        %v1179 = vmul.f32 %v1101, %v1117
        %v1180 = vmul.f32 %v1102, %v1117
        %v1181 = vmul.f32 %v1103, %v1117
        %v1182 = vmul.f32 %v1104, %v1117
        %v1183 = vpack.c.bf16 %v1119, %v1119
        %v1184 = vpack.c.bf16 %v1120, %v1120
        %v1185 = vpack.c.bf16 %v1121, %v1121
        %v1186 = vpack.c.bf16 %v1122, %v1122
        %v1187 = vpack.c.bf16 %v1123, %v1123
        %v1188 = vpack.c.bf16 %v1124, %v1124
        %v1189 = vpack.c.bf16 %v1125, %v1125
        %v1190 = vpack.c.bf16 %v1126, %v1126
        %v1191 = vpack.c.bf16 %v1127, %v1127
        %v1192 = vpack.c.bf16 %v1128, %v1128
        %v1193 = vpack.c.bf16 %v1129, %v1129
        %v1194 = vpack.c.bf16 %v1130, %v1130
        %v1195 = vpack.c.bf16 %v1131, %v1131
        %v1196 = vpack.c.bf16 %v1132, %v1132
        %v1197 = vpack.c.bf16 %v1133, %v1133
        %v1198 = vpack.c.bf16 %v1134, %v1134
        %v1199 = vpack.c.bf16 %v1135, %v1135
        %v1200 = vpack.c.bf16 %v1136, %v1136
        %v1201 = vpack.c.bf16 %v1137, %v1137
        %v1202 = vpack.c.bf16 %v1138, %v1138
        %v1203 = vpack.c.bf16 %v1139, %v1139
        %v1204 = vpack.c.bf16 %v1140, %v1140
        %v1205 = vpack.c.bf16 %v1141, %v1141
        %v1206 = vpack.c.bf16 %v1142, %v1142
        %v1207 = vpack.c.bf16 %v1143, %v1143
        %v1208 = vpack.c.bf16 %v1144, %v1144
        %v1209 = vpack.c.bf16 %v1145, %v1145
        %v1210 = vpack.c.bf16 %v1146, %v1146
        %v1211 = vpack.c.bf16 %v1147, %v1147
        %v1212 = vpack.c.bf16 %v1148, %v1148
        %v1213 = vpack.c.bf16 %v1149, %v1149
        %v1214 = vpack.c.bf16 %v1150, %v1150
        %v1215 = vpack.c.bf16 %v1151, %v1151
        %v1216 = vpack.c.bf16 %v1152, %v1152
        %v1217 = vpack.c.bf16 %v1153, %v1153
        %v1218 = vpack.c.bf16 %v1154, %v1154
        %v1219 = vpack.c.bf16 %v1155, %v1155
        %v1220 = vpack.c.bf16 %v1156, %v1156
        %v1221 = vpack.c.bf16 %v1157, %v1157
        %v1222 = vpack.c.bf16 %v1158, %v1158
        %v1223 = vpack.c.bf16 %v1159, %v1159
        %v1224 = vpack.c.bf16 %v1160, %v1160
        %v1225 = vpack.c.bf16 %v1161, %v1161
        %v1226 = vpack.c.bf16 %v1162, %v1162
        %v1227 = vpack.c.bf16 %v1163, %v1163
        %v1228 = vpack.c.bf16 %v1164, %v1164
        %v1229 = vpack.c.bf16 %v1165, %v1165
        %v1230 = vpack.c.bf16 %v1166, %v1166
        %v1231 = vpack.c.bf16 %v1167, %v1167
        %v1232 = vpack.c.bf16 %v1168, %v1168
        %v1233 = vpack.c.bf16 %v1169, %v1169
        %v1234 = vpack.c.bf16 %v1170, %v1170
        %v1235 = vpack.c.bf16 %v1171, %v1171
        %v1236 = vpack.c.bf16 %v1172, %v1172
        %v1237 = vpack.c.bf16 %v1173, %v1173
        %v1238 = vpack.c.bf16 %v1174, %v1174
        %v1239 = vpack.c.bf16 %v1175, %v1175
        %v1240 = vpack.c.bf16 %v1176, %v1176
        %v1241 = vpack.c.bf16 %v1177, %v1177
        %v1242 = vpack.c.bf16 %v1178, %v1178
        %v1243 = vpack.c.bf16 %v1179, %v1179
        %v1244 = vpack.c.bf16 %v1180, %v1180
        %v1245 = vpack.c.bf16 %v1181, %v1181
        %v1246 = vpack.c.bf16 %v1182, %v1182
        %vm1247 = vcmask 93184
        %1248 = vst.msk [vmem:[%s161] sm:$0xf] %vm1247, %v1183
        %1249 = vst.msk [vmem:[%s161 + $0x4] sm:$0xf] %vm1247, %v1184
        %1250 = vst.msk [vmem:[%s161 + $0x8] sm:$0xf] %vm1247, %v1185
        %1251 = vst.msk [vmem:[%s161 + $0xc] sm:$0xf] %vm1247, %v1186
        %1252 = vst.msk [vmem:[%s161 + $0x10] sm:$0xf] %vm1247, %v1187
        %1253 = vst.msk [vmem:[%s161 + $0x14] sm:$0xf] %vm1247, %v1188
        %1254 = vst.msk [vmem:[%s161 + $0x18] sm:$0xf] %vm1247, %v1189
        %1255 = vst.msk [vmem:[%s161 + $0x1c] sm:$0xf] %vm1247, %v1190
        %1256 = vst.msk [vmem:[%s161 + $0x20] sm:$0xf] %vm1247, %v1191
        %1257 = vst.msk [vmem:[%s161 + $0x24] sm:$0xf] %vm1247, %v1192
        %1258 = vst.msk [vmem:[%s161 + $0x28] sm:$0xf] %vm1247, %v1193
        %1259 = vst.msk [vmem:[%s161 + $0x2c] sm:$0xf] %vm1247, %v1194
        %1260 = vst.msk [vmem:[%s161 + $0x30] sm:$0xf] %vm1247, %v1195
        %1261 = vst.msk [vmem:[%s161 + $0x34] sm:$0xf] %vm1247, %v1196
        %1262 = vst.msk [vmem:[%s161 + $0x38] sm:$0xf] %vm1247, %v1197
        %1263 = vst.msk [vmem:[%s161 + $0x3c] sm:$0xf] %vm1247, %v1198
        %1264 = vst.msk [vmem:[%s161 + $0x40] sm:$0xf] %vm1247, %v1199
        %1265 = vst.msk [vmem:[%s161 + $0x44] sm:$0xf] %vm1247, %v1200
        %1266 = vst.msk [vmem:[%s161 + $0x48] sm:$0xf] %vm1247, %v1201
        %1267 = vst.msk [vmem:[%s161 + $0x4c] sm:$0xf] %vm1247, %v1202
        %1268 = vst.msk [vmem:[%s161 + $0x50] sm:$0xf] %vm1247, %v1203
        %1269 = vst.msk [vmem:[%s161 + $0x54] sm:$0xf] %vm1247, %v1204
        %1270 = vst.msk [vmem:[%s161 + $0x58] sm:$0xf] %vm1247, %v1205
        %1271 = vst.msk [vmem:[%s161 + $0x5c] sm:$0xf] %vm1247, %v1206
        %1272 = vst.msk [vmem:[%s161 + $0x60] sm:$0xf] %vm1247, %v1207
        %1273 = vst.msk [vmem:[%s161 + $0x64] sm:$0xf] %vm1247, %v1208
        %1274 = vst.msk [vmem:[%s161 + $0x68] sm:$0xf] %vm1247, %v1209
        %1275 = vst.msk [vmem:[%s161 + $0x6c] sm:$0xf] %vm1247, %v1210
        %1276 = vst.msk [vmem:[%s161 + $0x70] sm:$0xf] %vm1247, %v1211
        %1277 = vst.msk [vmem:[%s161 + $0x74] sm:$0xf] %vm1247, %v1212
        %1278 = vst.msk [vmem:[%s161 + $0x78] sm:$0xf] %vm1247, %v1213
        %1279 = vst.msk [vmem:[%s161 + $0x7c] sm:$0xf] %vm1247, %v1214
        %1280 = vst.msk [vmem:[%s161 + $0x80] sm:$0xf] %vm1247, %v1215
        %1281 = vst.msk [vmem:[%s161 + $0x84] sm:$0xf] %vm1247, %v1216
        %1282 = vst.msk [vmem:[%s161 + $0x88] sm:$0xf] %vm1247, %v1217
        %1283 = vst.msk [vmem:[%s161 + $0x8c] sm:$0xf] %vm1247, %v1218
        %1284 = vst.msk [vmem:[%s161 + $0x90] sm:$0xf] %vm1247, %v1219
        %1285 = vst.msk [vmem:[%s161 + $0x94] sm:$0xf] %vm1247, %v1220
        %1286 = vst.msk [vmem:[%s161 + $0x98] sm:$0xf] %vm1247, %v1221
        %1287 = vst.msk [vmem:[%s161 + $0x9c] sm:$0xf] %vm1247, %v1222
        %1288 = vst.msk [vmem:[%s161 + $0xa0] sm:$0xf] %vm1247, %v1223
        %1289 = vst.msk [vmem:[%s161 + $0xa4] sm:$0xf] %vm1247, %v1224
        %1290 = vst.msk [vmem:[%s161 + $0xa8] sm:$0xf] %vm1247, %v1225
        %1291 = vst.msk [vmem:[%s161 + $0xac] sm:$0xf] %vm1247, %v1226
        %1292 = vst.msk [vmem:[%s161 + $0xb0] sm:$0xf] %vm1247, %v1227
        %1293 = vst.msk [vmem:[%s161 + $0xb4] sm:$0xf] %vm1247, %v1228
        %1294 = vst.msk [vmem:[%s161 + $0xb8] sm:$0xf] %vm1247, %v1229
        %1295 = vst.msk [vmem:[%s161 + $0xbc] sm:$0xf] %vm1247, %v1230
        %1296 = vst.msk [vmem:[%s161 + $0xc0] sm:$0xf] %vm1247, %v1231
        %1297 = vst.msk [vmem:[%s161 + $0xc4] sm:$0xf] %vm1247, %v1232
        %1298 = vst.msk [vmem:[%s161 + $0xc8] sm:$0xf] %vm1247, %v1233
        %1299 = vst.msk [vmem:[%s161 + $0xcc] sm:$0xf] %vm1247, %v1234
        %1300 = vst.msk [vmem:[%s161 + $0xd0] sm:$0xf] %vm1247, %v1235
        %1301 = vst.msk [vmem:[%s161 + $0xd4] sm:$0xf] %vm1247, %v1236
        %1302 = vst.msk [vmem:[%s161 + $0xd8] sm:$0xf] %vm1247, %v1237
        %1303 = vst.msk [vmem:[%s161 + $0xdc] sm:$0xf] %vm1247, %v1238
        %1304 = vst.msk [vmem:[%s161 + $0xe0] sm:$0xf] %vm1247, %v1239
        %1305 = vst.msk [vmem:[%s161 + $0xe4] sm:$0xf] %vm1247, %v1240
        %1306 = vst.msk [vmem:[%s161 + $0xe8] sm:$0xf] %vm1247, %v1241
        %1307 = vst.msk [vmem:[%s161 + $0xec] sm:$0xf] %vm1247, %v1242
        %1308 = vst.msk [vmem:[%s161 + $0xf0] sm:$0xf] %vm1247, %v1243
        %1309 = vst.msk [vmem:[%s161 + $0xf4] sm:$0xf] %vm1247, %v1244
        %1310 = vst.msk [vmem:[%s161 + $0xf8] sm:$0xf] %vm1247, %v1245
        %1311 = vst.msk [vmem:[%s161 + $0xfc] sm:$0xf] %vm1247, %v1246
      $region40: #{mm_bn_p.1} parent=27 // pred_fallthru
        _
      %s1312 = smul.u32 %s18, %s17
      %s1313 = smul.u32 64, %s1312
      %p1314 = scmp.lt.s32.totalorder %s1313, 63
      %s1315 = scalar_select %p1314, %s1313, 63
      %s1316 = smul.addr %s1315, 4
      %s1317 = scalar_lea.vmem %s2, %s1316
      // Predicated region
      $region41: #{mm_bn_p.1} parent=27 // pred_check
        %p1318 = pneg %p92
      $region42: #{mm_bn_p.1} parent=27 // pred_check_branch
        %1320 = sbr.rel (%p1318) target = $region44
      $region43: #{mm_bn_p.1} parent=27 // pred_region
        %s1321 = smul.u32 %s18, %s17
        %s1322 = smul.u32 64, %s1321
      $region44: #{mm_bn_p.1} parent=27 // pred_fallthru
        _
    $region28: #{mm_bn_p.1} parent=5 // pred_fallthru
      _
    %p1323 = scmp.le.s32.totalorder 2, %s8
    // Predicated region
    $region45: #{mm_bn_p.1} parent=5 // pred_check
      %p1324 = pneg %p1323
    $region46: #{mm_bn_p.1} parent=5 // pred_check_branch
      %1326 = sbr.rel (%p1324) target = $region48
    $region47: #{mm_bn_p.1} parent=5 // pred_region
      %s1327 = ssub.s32 %s8, 2
      // Predicated region
      $region49: #{mm_bn_p.1} parent=47 // pred_check
        %p1328 = pneg %p98
      $region50: #{mm_bn_p.1} parent=47 // pred_check_branch
        %1330 = sbr.rel (%p1328) target = $region52
      $region51: #{mm_bn_p.1} parent=47 // pred_region
        %s1331 = smul.u32 %s20, %s19
        %s1332 = smul.u32 64, %s1331
        %p1333 = scmp.lt.s32.totalorder %s1332, 63
        %s1334 = scalar_select %p1333, %s1332, 63
        %s1335 = smul.addr %s1334, 4
        %s1336 = scalar_lea.vmem %s2, %s1335
      $region52: #{mm_bn_p.1} parent=47 // pred_fallthru
        _
    $region48: #{mm_bn_p.1} parent=5 // pred_fallthru
      _
  $region6: #{mm_bn_p.1} parent=0 // loop_footer
    %s12 = sadd.s32 1, %s8
  $region7: #{mm_bn_p.1} parent=0 // loop_footer_branch
    %7 = sbr.rel target = $region3
  $region8: #{mm_bn_p.1} parent=0 // loop_exit
    _

</llo_original>
